<compile_context>
chip_gen: v6e
topology: v6e:2x2x1
jax: 0.10.0
libtpu: 0.0.40
codegen_flags: <defaults>
</compile_context>

<pallas_src>
import math

import jax
import jax.numpy as jnp
from jax import lax
from jax.experimental import pallas as pl
from jax.experimental.pallas import tpu as pltpu

MIB = 1 << 20
_CompilerParams = getattr(pltpu, "CompilerParams", None) or getattr(pltpu, "TPUCompilerParams")
_SINGLE_BUFFER_STATE = {"ok": None}   # None = untried; set True/False after first attempt


def _round_up(v: int, m: int) -> int:
    return (v + m - 1) // m * m


# ------------------------------ Pallas kernels ------------------------------ #
def fused_kernel(x_ref, a_ref, w_in_ref, b_in_ref, w1_ref, b1_ref, w2p_ref, bp_ref, o_ref):
    """Whole forward in one kernel, everything resident in VMEM (no grid).

       out = A_hat @ (relu(A_hat @ (relu(X @ W_in + b_in) @ W1) + b1) @ W2') + b'
    """
    f32 = jnp.float32
    h = jnp.dot(x_ref[...], w_in_ref[...], preferred_element_type=f32) + b_in_ref[...]
    z1 = jnp.dot(jnp.maximum(h, 0.0).astype(jnp.bfloat16), w1_ref[...],
                 preferred_element_type=f32).astype(jnp.bfloat16)
    h = jnp.dot(a_ref[...], z1, preferred_element_type=f32) + b1_ref[...]
    z2 = jnp.dot(jnp.maximum(h, 0.0).astype(jnp.bfloat16), w2p_ref[...],
                 preferred_element_type=f32).astype(jnp.bfloat16)
    o_ref[...] = jnp.dot(a_ref[...], z2, preferred_element_type=f32) + bp_ref[...]


def proj_kernel(x_ref, w_in_ref, b_in_ref, w1_ref, o_ref):
    """o = relu(x_tile @ W_in + b_in) @ W1   (input_proj + lin of conv1), bf16 out."""
    h = jnp.dot(x_ref[...], w_in_ref[...],
                preferred_element_type=jnp.float32) + b_in_ref[...]
    h = jnp.maximum(h, 0.0).astype(jnp.bfloat16)
    o_ref[...] = jnp.dot(h, w1_ref[...],
                         preferred_element_type=jnp.float32).astype(o_ref.dtype)


def agg_relu_proj_kernel(a_ref, z_ref, b_ref, w_ref, o_ref, acc_ref):
    """o = relu(A_row @ Z + b1) @ W2', with A/Z K-tiled and an f32 accumulator."""
    @pl.when(pl.program_id(1) == 0)
    def _():
        acc_ref[...] = jnp.zeros_like(acc_ref)

    acc_ref[...] += jnp.dot(a_ref[...], z_ref[...], preferred_element_type=jnp.float32)

    @pl.when(pl.program_id(1) == pl.num_programs(1) - 1)
    def _():
        h = jnp.maximum(acc_ref[...] + b_ref[...], 0.0).astype(jnp.bfloat16)
        o_ref[...] = jnp.dot(h, w_ref[...],
                             preferred_element_type=jnp.float32).astype(o_ref.dtype)


def agg_bias_kernel(a_ref, z_ref, b_ref, o_ref, acc_ref):
    """o = A_row @ Z + b', with A/Z K-tiled (conv2 aggregation + fused output_proj)."""
    @pl.when(pl.program_id(1) == 0)
    def _():
        acc_ref[...] = jnp.zeros_like(acc_ref)

    acc_ref[...] += jnp.dot(a_ref[...], z_ref[...], preferred_element_type=jnp.float32)

    @pl.when(pl.program_id(1) == pl.num_programs(1) - 1)
    def _():
        o_ref[...] = acc_ref[...] + b_ref[...]


# ------------------------------- glue (JAX) --------------------------------- #
def _tpu_config():
    """Generation-aware tile sizes & VMEM capacity (conservative fallback)."""
    kind = ""
    try:
        kind = jax.devices()[0].device_kind.lower()
    except Exception:
        pass
    if "v7" in kind:                                   # 64 MiB VMEM/core, 256-wide MXU
        vmem, row_tile = 64 * MIB, 256
    elif "v6" in kind:                                 # 128 MiB VMEM, 256-wide MXU
        vmem, row_tile = 128 * MIB, 512
    elif "v5 lite" in kind or "v5e" in kind or "v5lite" in kind:
        vmem, row_tile = 128 * MIB, 128                # 128-wide MXU: M=128 saturates it
    else:                                              # unknown: assume smallest budget
        vmem, row_tile = 64 * MIB, 256
    return {"kind": kind, "vmem": vmem, "row_tile": row_tile, "k_tile": 512}


def _edge_weights(edge_attr, num_edges):
    """edge_attr.sum(dim=1) followed by F.normalize(dim=0) (L2 over the edge axis)."""
    if edge_attr.shape[0] == 0:
        return jnp.zeros((num_edges,), jnp.float32)
    ew = edge_attr.sum(axis=1)
    return ew / jnp.maximum(jnp.linalg.norm(ew), 1e-12)


def _gcn_norm_dense(edge_index, edge_weight, num_nodes, n_pad):
    """PyG gcn_norm with self-loops as a dense [n_pad, n_pad] f32 matrix.

    A_hat[dst, src] = d(src)^-1/2 * w * d(dst)^-1/2; degrees are weighted
    in-degrees (scatter over destination) including unit self-loops.
    Padded rows/cols stay zero so padded nodes never contribute.
    """
    src, dst = edge_index[0], edge_index[1]
    loop = jnp.arange(num_nodes, dtype=src.dtype)
    src = jnp.concatenate([src, loop])
    dst = jnp.concatenate([dst, loop])
    w = jnp.concatenate([edge_weight.astype(jnp.float32),
                         jnp.ones((num_nodes,), jnp.float32)])
    deg = jnp.zeros((n_pad,), jnp.float32).at[dst].add(w)
    dis = jnp.where(deg > 0, lax.rsqrt(deg), 0.0)
    norm = dis[src] * w * dis[dst]
    return jnp.zeros((n_pad, n_pad), jnp.float32).at[dst, src].add(norm)


def init_params(key, input_dim, hidden_dim):
    ks = jax.random.split(key, 8)
    s = 0.1
    return dict(
        w_in=jax.random.normal(ks[0], (input_dim, hidden_dim), jnp.float32) * s,
        b_in=jax.random.normal(ks[1], (1, hidden_dim), jnp.float32) * s,
        w1=jax.random.normal(ks[2], (hidden_dim, hidden_dim), jnp.float32) * s,
        b1=jax.random.normal(ks[3], (1, hidden_dim), jnp.float32) * s,
        w2=jax.random.normal(ks[4], (hidden_dim, hidden_dim), jnp.float32) * s,
        b2=jax.random.normal(ks[5], (1, hidden_dim), jnp.float32) * s,
        w_out=jax.random.normal(ks[6], (hidden_dim, hidden_dim), jnp.float32) * s,
        b_out=jax.random.normal(ks[7], (1, hidden_dim), jnp.float32) * s,
    )


def _prepare(x, edge_index, edge_attr, params, node_mult):
    """Pad / cast all operands to the lane-dense bf16 layout the kernels use."""
    n, input_dim = x.shape
    hidden = params["w_in"].shape[1]
    n_pad = _round_up(n, node_mult)
    f_pad = _round_up(input_dim, 128)
    h_pad = _round_up(hidden, 128)

    ew = _edge_weights(edge_attr, edge_index.shape[1])
    a_hat = _gcn_norm_dense(edge_index, ew, n, n_pad).astype(jnp.bfloat16)

    def pad2(a, r, c, dtype):
        return jnp.zeros((r, c), dtype).at[:a.shape[0], :a.shape[1]].set(a.astype(dtype))

    # Fuse output_proj into conv2 (exact: no nonlinearity between them).
    w2p = params["w2"] @ params["w_out"]
    bp = params["b2"] @ params["w_out"] + params["b_out"]

    return dict(
        n=n, hidden=hidden, n_pad=n_pad, f_pad=f_pad, h_pad=h_pad,
        x=pad2(x, n_pad, f_pad, jnp.bfloat16),
        a=a_hat,
        w_in=pad2(params["w_in"], f_pad, h_pad, jnp.bfloat16),
        b_in=pad2(params["b_in"], 1, h_pad, jnp.float32),
        w1=pad2(params["w1"], h_pad, h_pad, jnp.bfloat16),
        b1=pad2(params["b1"], 1, h_pad, jnp.float32),
        w2p=pad2(w2p, h_pad, h_pad, jnp.bfloat16),
        bp=pad2(bp, 1, h_pad, jnp.float32),
    )


# ----------------------------- VMEM accounting ------------------------------ #
def _fused_vmem_bytes(n_pad, f_pad, h_pad):
    return (n_pad * n_pad * 2                           # A_hat (bf16)
            + n_pad * f_pad * 2                         # X (bf16)
            + (f_pad * h_pad + 2 * h_pad * h_pad) * 2   # weights (bf16)
            + 4 * h_pad * 4                             # biases (f32)
            + n_pad * h_pad * 4                         # output (f32)
            + 3 * n_pad * h_pad * 4)                    # intermediates (h f32, Z bf16)


def _tiled_vmem_bytes(row_tile, k_tile, f_pad, h_pad, single_buffer):
    wb = 1 if single_buffer else 2                      # buffer count for invariant blocks
    call1 = (2 * row_tile * f_pad * 2
             + wb * (f_pad * h_pad + h_pad * h_pad) * 2 + wb * h_pad * 4
             + 2 * row_tile * h_pad * 2)
    call2 = (2 * row_tile * k_tile * 2 + 2 * k_tile * h_pad * 2
             + wb * h_pad * h_pad * 2 + wb * h_pad * 4
             + 2 * row_tile * h_pad * 2 + row_tile * h_pad * 4)
    call3 = (2 * row_tile * k_tile * 2 + 2 * k_tile * h_pad * 2
             + wb * h_pad * 4
             + 2 * row_tile * h_pad * 4 + row_tile * h_pad * 4)
    return max(call1, call2, call3)


def _vmem_limit(cfg, estimate):
    return max(16 * MIB, min(int(cfg["vmem"] * 0.78), estimate + 8 * MIB))


# --------------------------------- runners ----------------------------------- #
def _run_pallas_fused(p, cfg):
    est = _fused_vmem_bytes(p["n_pad"], p["f_pad"], p["h_pad"])
    out = pl.pallas_call(
        fused_kernel,
        out_shape=jax.ShapeDtypeStruct((p["n_pad"], p["h_pad"]), jnp.float32),
        compiler_params=_CompilerParams(vmem_limit_bytes=_vmem_limit(cfg, est)),
    )(p["x"], p["a"], p["w_in"], p["b_in"], p["w1"], p["b1"], p["w2p"], p["bp"])
    return out[: p["n"], : p["hidden"]]


def _const_spec(block_shape, single_buffer):
    """BlockSpec for a grid-invariant operand; single-buffered when supported."""
    idx = lambda *_: (0,) * len(block_shape)
    if single_buffer and hasattr(pl, "Buffered"):
        return pl.BlockSpec(block_shape, idx, pipeline_mode=pl.Buffered(1))
    return pl.BlockSpec(block_shape, idx)


def _run_pallas_tiled_impl(p, cfg, row_tile, k_tile, single_buffer):
    n_pad, f_pad, h_pad = p["n_pad"], p["f_pad"], p["h_pad"]
    n_rows, n_k = n_pad // row_tile, n_pad // k_tile

    est = _tiled_vmem_bytes(row_tile, k_tile, f_pad, h_pad, single_buffer)
    limit = _vmem_limit(cfg, est)
    cp_rows = _CompilerParams(dimension_semantics=("parallel",), vmem_limit_bytes=limit)
    cp_rows_k = _CompilerParams(dimension_semantics=("parallel", "arbitrary"),
                                vmem_limit_bytes=limit)

    # Z1 = relu(X @ W_in + b_in) @ W1                         (row-tiled)
    z1 = pl.pallas_call(
        proj_kernel,
        out_shape=jax.ShapeDtypeStruct((n_pad, h_pad), jnp.bfloat16),
        grid=(n_rows,),
        in_specs=[pl.BlockSpec((row_tile, f_pad), lambda i: (i, 0)),
                  _const_spec((f_pad, h_pad), single_buffer),
                  _const_spec((1, h_pad), single_buffer),
                  _const_spec((h_pad, h_pad), single_buffer)],
        out_specs=pl.BlockSpec((row_tile, h_pad), lambda i: (i, 0)),
        compiler_params=cp_rows,
    )(p["x"], p["w_in"], p["b_in"], p["w1"])

    # Z2 = relu(A_hat @ Z1 + b1) @ W2'            (row x K tiled, f32 accumulator)
    z2 = pl.pallas_call(
        agg_relu_proj_kernel,
        out_shape=jax.ShapeDtypeStruct((n_pad, h_pad), jnp.bfloat16),
        grid=(n_rows, n_k),
        in_specs=[pl.BlockSpec((row_tile, k_tile), lambda i, k: (i, k)),
                  pl.BlockSpec((k_tile, h_pad), lambda i, k: (k, 0)),
                  _const_spec((1, h_pad), single_buffer),
                  _const_spec((h_pad, h_pad), single_buffer)],
        out_specs=pl.BlockSpec((row_tile, h_pad), lambda i, k: (i, 0)),
        scratch_shapes=[pltpu.VMEM((row_tile, h_pad), jnp.float32)],
        compiler_params=cp_rows_k,
    )(p["a"], z1, p["b1"], p["w2p"])

    # OUT = A_hat @ Z2 + (b2 @ W_out + b_out)     (row x K tiled, f32 accumulator)
    out = pl.pallas_call(
        agg_bias_kernel,
        out_shape=jax.ShapeDtypeStruct((n_pad, h_pad), jnp.float32),
        grid=(n_rows, n_k),
        in_specs=[pl.BlockSpec((row_tile, k_tile), lambda i, k: (i, k)),
                  pl.BlockSpec((k_tile, h_pad), lambda i, k: (k, 0)),
                  _const_spec((1, h_pad), single_buffer)],
        out_specs=pl.BlockSpec((row_tile, h_pad), lambda i, k: (i, 0)),
        scratch_shapes=[pltpu.VMEM((row_tile, h_pad), jnp.float32)],
        compiler_params=cp_rows_k,
    )(p["a"], z2, p["bp"])

    return out[: p["n"], : p["hidden"]]


def _run_pallas_tiled(p, cfg, row_tile, k_tile):
    """Try single-buffered invariant operands first; fall back if unsupported."""
    if _SINGLE_BUFFER_STATE["ok"] is not False:
        try:
            out = _run_pallas_tiled_impl(p, cfg, row_tile, k_tile, single_buffer=True)
            _SINGLE_BUFFER_STATE["ok"] = True
            return out
        except Exception:
            _SINGLE_BUFFER_STATE["ok"] = False
    return _run_pallas_tiled_impl(p, cfg, row_tile, k_tile, single_buffer=False)


# --------------------------------- forward ----------------------------------- #
def gnn_reranker_forward(x, edge_index, edge_attr, params, *,
                         force_path=None, row_tile=None, k_tile=None):
    """JAX/Pallas forward matching GNNReranker.forward (eval mode)."""
    if edge_index.shape[1] == 0:
        # The PyTorch forward skips conv1/conv2 entirely when there are no edges
        # (eval-mode dropout = identity; relu applied twice == once).
        h = jnp.maximum(x @ params["w_in"] + params["b_in"], 0.0)
        return h @ params["w_out"] + params["b_out"]

    cfg = _tpu_config()
    n, input_dim = x.shape
    hidden = params["w_in"].shape[1]
    f_pad = _round_up(input_dim, 128)
    h_pad = _round_up(hidden, 128)

    fused_ok = (_fused_vmem_bytes(_round_up(n, 128), f_pad, h_pad) + 4 * MIB
                <= cfg["vmem"] // 2)
    use_fused = {"fused": True, "tiled": False}.get(force_path, fused_ok)

    if use_fused:
        p = _prepare(x, edge_index, edge_attr, params, node_mult=128)
        return _run_pallas_fused(p, cfg)

    rt = row_tile or cfg["row_tile"]
    kt = k_tile or cfg["k_tile"]
    node_mult = rt * kt // math.gcd(rt, kt)
    p = _prepare(x, edge_index, edge_attr, params, node_mult=node_mult)
    return _run_pallas_tiled(p, cfg, rt, kt)


# ------------------------------- references --------------------------------- #
def _reference_forward(x, edge_index, edge_attr, params):
    """Pure-f32 JAX reference mirroring the PyTorch forward (eval mode)."""
    n = x.shape[0]
    ew = _edge_weights(edge_attr, edge_index.shape[1])
    a_hat = _gcn_norm_dense(edge_index, ew, n, n)
    h = jnp.maximum(x @ params["w_in"] + params["b_in"], 0.0)
    h = jnp.maximum(a_hat @ (h @ params["w1"]) + params["b1"], 0.0)
    h = a_hat @ (h @ params["w2"]) + params["b2"]
    return h @ params["w_out"] + params["b_out"]


def _mixed_reference(p):
    """Pure-JAX reference using the same bf16-operand / f32-accumulate math as
    the Pallas kernels (tight check on the kernel plumbing itself)."""
    f32 = jnp.float32
    h = jnp.dot(p["x"], p["w_in"], preferred_element_type=f32) + p["b_in"]
    z1 = jnp.dot(jnp.maximum(h, 0.0).astype(jnp.bfloat16), p["w1"],
                 preferred_element_type=f32).astype(jnp.bfloat16)
    h = jnp.dot(p["a"], z1, preferred_element_type=f32) + p["b1"]
    z2 = jnp.dot(jnp.maximum(h, 0.0).astype(jnp.bfloat16), p["w2p"],
                 preferred_element_type=f32).astype(jnp.bfloat16)
    out = jnp.dot(p["a"], z2, preferred_element_type=f32) + p["bp"]
    return out[: p["n"], : p["hidden"]]


# ---------------------------------- main ------------------------------------ #
if __name__ == "__main__":
    key = jax.random.PRNGKey(0)
    k_x, k_ei, k_ea, k_p = jax.random.split(key, 4)

    num_nodes, input_dim, hidden_dim = 200, 96, 128     # hidden = module default
    num_edges, edge_attr_dim = 600, 4

    x = jax.random.normal(k_x, (num_nodes, input_dim), jnp.float32)
    edge_index = jax.random.randint(k_ei, (2, num_edges), 0, num_nodes, jnp.int32)
    edge_attr = jax.random.uniform(k_ea, (num_edges, edge_attr_dim), jnp.float32)
    params = init_params(k_p, input_dim, hidden_dim)

    # 1) Auto path — at this size the single fused kernel is selected.
    out = jax.block_until_ready(gnn_reranker_forward(x, edge_index, edge_attr, params))
    assert out.shape == (num_nodes, hidden_dim) and out.dtype == jnp.float32

    # Tight check: identical bf16/f32-acc math, plain JAX vs the fused Pallas kernel.
    mixed = _mixed_reference(_prepare(x, edge_index, edge_attr, params, node_mult=128))
    assert jnp.allclose(out, mixed, atol=1e-2, rtol=1e-2), \
        float(jnp.max(jnp.abs(out - mixed)))

    # Loose check vs the full-f32 reference (tolerance for bf16 MXU feeds).
    ref = _reference_forward(x, edge_index, edge_attr, params)
    assert jnp.allclose(out, ref, atol=1e-1, rtol=1e-1), \
        float(jnp.max(jnp.abs(out - ref)))

    # 2) K-tiled large-graph path, forced with small tiles (2 row tiles x 2 K tiles)
    #    so the accumulator / pl.when init-finalize logic is exercised and checked.
    out_tiled = jax.block_until_ready(
        gnn_reranker_forward(x, edge_index, edge_attr, params,
                             force_path="tiled", row_tile=128, k_tile=128))
    assert out_tiled.shape == (num_nodes, hidden_dim)
    assert jnp.allclose(out_tiled, out, atol=2e-2, rtol=2e-2), \
        float(jnp.max(jnp.abs(out_tiled - out)))

    # 3) Zero-edge special case (pure JAX, mirrors the PyTorch branch exactly).
    out_empty = gnn_reranker_forward(
        x, jnp.zeros((2, 0), jnp.int32), jnp.zeros((0, edge_attr_dim), jnp.float32), params)
    assert out_empty.shape == (num_nodes, hidden_dim)

    print("KERNEL_OK")
</pallas_src>

<mosaic_0001>
module attributes {stable_mosaic.version = 11 : i64} {
  func.func @fused_kernel(%arg0: memref<256x128xbf16, #tpu.memory_space<vmem>>, %arg1: memref<256x256xbf16, #tpu.memory_space<vmem>>, %arg2: memref<128x128xbf16, #tpu.memory_space<vmem>>, %arg3: memref<1x128xf32, #tpu.memory_space<vmem>>, %arg4: memref<128x128xbf16, #tpu.memory_space<vmem>>, %arg5: memref<1x128xf32, #tpu.memory_space<vmem>>, %arg6: memref<128x128xbf16, #tpu.memory_space<vmem>>, %arg7: memref<1x128xf32, #tpu.memory_space<vmem>>, %arg8: memref<256x128xf32, #tpu.memory_space<vmem>>) attributes {dimension_semantics = [], scalar_prefetch = 0 : i64, scratch_operands = 0 : i64, tpu.core_type = #tpu.core_type<tc>} {
    %c0 = arith.constant 0 : index
    %c0_0 = arith.constant 0 : index
    %0 = vector.load %arg0[%c0, %c0_0] : memref<256x128xbf16, #tpu.memory_space<vmem>>, vector<256x128xbf16>
    %c0_1 = arith.constant 0 : index
    %c0_2 = arith.constant 0 : index
    %1 = vector.load %arg2[%c0_1, %c0_2] : memref<128x128xbf16, #tpu.memory_space<vmem>>, vector<128x128xbf16>
    %cst = arith.constant dense<0.000000e+00> : vector<256x128xf32>
    %2 = tpu.matmul %0, %1, %cst {dimension_numbers = #tpu.dot_dimension_numbers<[1], [0], [0], [1], [0, 0, 1, 1], [], []>} : vector<256x128xbf16>, vector<128x128xbf16>, vector<256x128xf32> -> vector<256x128xf32>
    %c0_3 = arith.constant 0 : index
    %c0_4 = arith.constant 0 : index
    %3 = vector.load %arg3[%c0_3, %c0_4] : memref<1x128xf32, #tpu.memory_space<vmem>>, vector<1x128xf32>
    %4 = vector.broadcast %3 : vector<1x128xf32> to vector<256x128xf32>
    %5 = arith.addf %2, %4 : vector<256x128xf32>
    %cst_5 = arith.constant 0.000000e+00 : f32
    %6 = vector.broadcast %cst_5 : f32 to vector<256x128xf32>
    %7 = arith.maximumf %5, %6 : vector<256x128xf32>
    %8 = arith.truncf %7 : vector<256x128xf32> to vector<256x128xbf16>
    %c0_6 = arith.constant 0 : index
    %c0_7 = arith.constant 0 : index
    %9 = vector.load %arg4[%c0_6, %c0_7] : memref<128x128xbf16, #tpu.memory_space<vmem>>, vector<128x128xbf16>
    %cst_8 = arith.constant dense<0.000000e+00> : vector<256x128xf32>
    %10 = tpu.matmul %8, %9, %cst_8 {dimension_numbers = #tpu.dot_dimension_numbers<[1], [0], [0], [1], [0, 0, 1, 1], [], []>} : vector<256x128xbf16>, vector<128x128xbf16>, vector<256x128xf32> -> vector<256x128xf32>
    %11 = arith.truncf %10 : vector<256x128xf32> to vector<256x128xbf16>
    %c0_9 = arith.constant 0 : index
    %c0_10 = arith.constant 0 : index
    %12 = vector.load %arg1[%c0_9, %c0_10] : memref<256x256xbf16, #tpu.memory_space<vmem>>, vector<256x256xbf16>
    %cst_11 = arith.constant dense<0.000000e+00> : vector<256x128xf32>
    %13 = tpu.matmul %12, %11, %cst_11 {dimension_numbers = #tpu.dot_dimension_numbers<[1], [0], [0], [1], [0, 0, 1, 1], [], []>} : vector<256x256xbf16>, vector<256x128xbf16>, vector<256x128xf32> -> vector<256x128xf32>
    %c0_12 = arith.constant 0 : index
    %c0_13 = arith.constant 0 : index
    %14 = vector.load %arg5[%c0_12, %c0_13] : memref<1x128xf32, #tpu.memory_space<vmem>>, vector<1x128xf32>
    %15 = vector.broadcast %14 : vector<1x128xf32> to vector<256x128xf32>
    %16 = arith.addf %13, %15 : vector<256x128xf32>
    %cst_14 = arith.constant 0.000000e+00 : f32
    %17 = vector.broadcast %cst_14 : f32 to vector<256x128xf32>
    %18 = arith.maximumf %16, %17 : vector<256x128xf32>
    %19 = arith.truncf %18 : vector<256x128xf32> to vector<256x128xbf16>
    %c0_15 = arith.constant 0 : index
    %c0_16 = arith.constant 0 : index
    %20 = vector.load %arg6[%c0_15, %c0_16] : memref<128x128xbf16, #tpu.memory_space<vmem>>, vector<128x128xbf16>
    %cst_17 = arith.constant dense<0.000000e+00> : vector<256x128xf32>
    %21 = tpu.matmul %19, %20, %cst_17 {dimension_numbers = #tpu.dot_dimension_numbers<[1], [0], [0], [1], [0, 0, 1, 1], [], []>} : vector<256x128xbf16>, vector<128x128xbf16>, vector<256x128xf32> -> vector<256x128xf32>
    %22 = arith.truncf %21 : vector<256x128xf32> to vector<256x128xbf16>
    %c0_18 = arith.constant 0 : index
    %c0_19 = arith.constant 0 : index
    %23 = vector.load %arg1[%c0_18, %c0_19] : memref<256x256xbf16, #tpu.memory_space<vmem>>, vector<256x256xbf16>
    %cst_20 = arith.constant dense<0.000000e+00> : vector<256x128xf32>
    %24 = tpu.matmul %23, %22, %cst_20 {dimension_numbers = #tpu.dot_dimension_numbers<[1], [0], [0], [1], [0, 0, 1, 1], [], []>} : vector<256x256xbf16>, vector<256x128xbf16>, vector<256x128xf32> -> vector<256x128xf32>
    %c0_21 = arith.constant 0 : index
    %c0_22 = arith.constant 0 : index
    %25 = vector.load %arg7[%c0_21, %c0_22] : memref<1x128xf32, #tpu.memory_space<vmem>>, vector<1x128xf32>
    %26 = vector.broadcast %25 : vector<1x128xf32> to vector<256x128xf32>
    %27 = arith.addf %24, %26 : vector<256x128xf32>
    %c0_23 = arith.constant 0 : index
    %c0_24 = arith.constant 0 : index
    %28 = vector.load %arg8[%c0_23, %c0_24] : memref<256x128xf32, #tpu.memory_space<vmem>>, vector<256x128xf32>
    tpu.vector_store %arg8[%c0_23, %c0_24], %27 {strides = array<i32>} : memref<256x128xf32, #tpu.memory_space<vmem>>, vector<256x128xf32>,
    return
  }
}

</mosaic_0001>

<llo_original>
// kernel: tpu_custom_call.1
$region0: #{tpu_custom_call.1}
  #allocation0 [shape = 'u32[]', space=smem, size = 0x4, offset = 0x4, fixed_abs, tag = 'smem constant byte address 0x4 - core index']
  #allocation1 [shape = 'u32[144,128]{1,0:T(1,128)}', space=vmem, size = 0x12000, scoped, tag = 'internal scratch']
  %s0 = inlined_call_operand.hbm [shape: bf16[256,128], index: 0, kind: input, shape index: {}]
  %s1 = inlined_call_operand.hbm [shape: bf16[256,256], index: 1, kind: input, shape index: {}]
  %s2 = inlined_call_operand.hbm [shape: bf16[128,128], index: 2, kind: input, shape index: {}]
  %s3 = inlined_call_operand.vmem [shape: f32[1,128], index: 3, kind: input, shape index: {}]
  %s4 = inlined_call_operand.hbm [shape: bf16[128,128], index: 4, kind: input, shape index: {}]
  %s5 = inlined_call_operand.vmem [shape: f32[1,128], index: 5, kind: input, shape index: {}]
  %s6 = inlined_call_operand.hbm [shape: bf16[128,128], index: 6, kind: input, shape index: {}]
  %s7 = inlined_call_operand.vmem [shape: f32[1,128], index: 7, kind: input, shape index: {}]
  %s8 = inlined_call_operand.hbm [shape: f32[256,128], index: 8, kind: output, shape index: {}]
  %s9 = sld [smem:[#allocation0]]
  $region62: #{tpu_custom_call.1} parent=0
    _
  %s11 = ssub.s32 1, %s9
  %s12 = scalar_select 0, %s11, %s9
  $region1: #{tpu_custom_call.1} parent=0
    #allocation2 [shape = 'u8[65536]{0}', space=vmem, size = 0x10000, scoped, tag = 'input window, operand 0, single buffered']
    #allocation3 [shape = 's32[1]{0}', space=sflag, size = 0x4, scoped, tag = 'scoped memory for tpu_custom_call.1']
    #allocation4 [shape = 's32[1]{0}', space=sflag, size = 0x4, scoped, tag = 'scoped memory for tpu_custom_call.1']
    #allocation5 [shape = 'u8[131072]{0}', space=vmem, size = 0x20000, scoped, tag = 'input window, operand 1, single buffered']
    #allocation6 [shape = 's32[1]{0}', space=sflag, size = 0x4, scoped, tag = 'scoped memory for tpu_custom_call.1']
    #allocation7 [shape = 'u8[32768]{0}', space=vmem, size = 0x8000, scoped, tag = 'input window, operand 2, single buffered']
    #allocation8 [shape = 'u8[32768]{0}', space=vmem, size = 0x8000, scoped, tag = 'input window, operand 4, single buffered']
    #allocation9 [shape = 's32[1]{0}', space=sflag, size = 0x4, scoped, tag = 'scoped memory for tpu_custom_call.1']
    #allocation10 [shape = 'u8[32768]{0}', space=vmem, size = 0x8000, scoped, tag = 'input window, operand 6, single buffered']
    #allocation11 [shape = 'u8[131072]{0}', space=vmem, size = 0x20000, scoped, tag = 'output window, operand 0, single buffered']
    %13 = vsyncpa [#allocation3], 0
    %14 = vsyncpa [#allocation6], 0
    %15 = vsyncpa [#allocation9], 0
    %16 = vsyncpa [#allocation4], 0
    // Predicated region
    $region2: #{tpu_custom_call.1} parent=1 // pred_check
      _
    $region3: #{tpu_custom_call.1} parent=1 // pred_check_branch
      %18 = sbr.rel (0) target = $region5
    $region4: #{tpu_custom_call.1} parent=1 // pred_region
      %s20 = ssub.s32 2048, 2048
      %21 = vsyncadd [#allocation3], %s20
      %s22 = sshll.u32 [#allocation2], 4
      %s23 = int_to_ptr.vmem [resolvable:$true] %s22
      %28 = dma.hbm_to_vmem [thread:$0]  %s0, 2048, %s23, [#allocation3], 64, 64, 4
    $region5: #{tpu_custom_call.1} parent=1 // pred_fallthru
      _
    // Predicated region
    $region6: #{tpu_custom_call.1} parent=1 // pred_check
      _
    $region7: #{tpu_custom_call.1} parent=1 // pred_check_branch
      %30 = sbr.rel (0) target = $region9
    $region8: #{tpu_custom_call.1} parent=1 // pred_region
      %s32 = ssub.s32 4096, 4096
      %33 = vsyncadd [#allocation6], %s32
      %s34 = sshll.u32 [#allocation5], 4
      %s35 = int_to_ptr.vmem [resolvable:$true] %s34
      %40 = dma.hbm_to_vmem [thread:$0]  %s1, 4096, %s35, [#allocation6], 128, 128, 8
    $region9: #{tpu_custom_call.1} parent=1 // pred_fallthru
      _
    // Predicated region
    $region10: #{tpu_custom_call.1} parent=1 // pred_check
      _
    $region11: #{tpu_custom_call.1} parent=1 // pred_check_branch
      %42 = sbr.rel (0) target = $region13
    $region12: #{tpu_custom_call.1} parent=1 // pred_region
      %s44 = ssub.s32 1024, 1024
      %45 = vsyncadd [#allocation6], %s44
      %s46 = sshll.u32 [#allocation7], 4
      %s47 = int_to_ptr.vmem [resolvable:$true] %s46
      %52 = dma.hbm_to_vmem [thread:$0]  %s2, 1024, %s47, [#allocation6], 64, 64, 4
    $region13: #{tpu_custom_call.1} parent=1 // pred_fallthru
      _
    // Predicated region
    $region14: #{tpu_custom_call.1} parent=1 // pred_check
      _
    $region15: #{tpu_custom_call.1} parent=1 // pred_check_branch
      %54 = sbr.rel (0) target = $region17
    $region16: #{tpu_custom_call.1} parent=1 // pred_region
      _
    $region17: #{tpu_custom_call.1} parent=1 // pred_fallthru
      _
    // Predicated region
    $region18: #{tpu_custom_call.1} parent=1 // pred_check
      _
    $region19: #{tpu_custom_call.1} parent=1 // pred_check_branch
      %56 = sbr.rel (0) target = $region21
    $region20: #{tpu_custom_call.1} parent=1 // pred_region
      %s58 = ssub.s32 1024, 1024
      %59 = vsyncadd [#allocation9], %s58
      %s60 = sshll.u32 [#allocation8], 4
      %s61 = int_to_ptr.vmem [resolvable:$true] %s60
      %66 = dma.hbm_to_vmem [thread:$0]  %s4, 1024, %s61, [#allocation9], 64, 64, 4
    $region21: #{tpu_custom_call.1} parent=1 // pred_fallthru
      _
    // Predicated region
    $region22: #{tpu_custom_call.1} parent=1 // pred_check
      _
    $region23: #{tpu_custom_call.1} parent=1 // pred_check_branch
      %68 = sbr.rel (0) target = $region25
    $region24: #{tpu_custom_call.1} parent=1 // pred_region
      _
    $region25: #{tpu_custom_call.1} parent=1 // pred_fallthru
      _
    // Predicated region
    $region26: #{tpu_custom_call.1} parent=1 // pred_check
      _
    $region27: #{tpu_custom_call.1} parent=1 // pred_check_branch
      %70 = sbr.rel (0) target = $region29
    $region28: #{tpu_custom_call.1} parent=1 // pred_region
      %s72 = ssub.s32 1024, 1024
      %73 = vsyncadd [#allocation9], %s72
      %s74 = sshll.u32 [#allocation10], 4
      %s75 = int_to_ptr.vmem [resolvable:$true] %s74
      %80 = dma.hbm_to_vmem [thread:$0]  %s6, 1024, %s75, [#allocation9], 64, 64, 4
    $region29: #{tpu_custom_call.1} parent=1 // pred_fallthru
      _
    // Predicated region
    $region30: #{tpu_custom_call.1} parent=1 // pred_check
      _
    $region31: #{tpu_custom_call.1} parent=1 // pred_check_branch
      %82 = sbr.rel (0) target = $region33
    $region32: #{tpu_custom_call.1} parent=1 // pred_region
      _
    $region33: #{tpu_custom_call.1} parent=1 // pred_fallthru
      _
    // Predicated region
    $region34: #{tpu_custom_call.1} parent=1 // pred_check
      _
    $region35: #{tpu_custom_call.1} parent=1 // pred_check_branch
      %84 = sbr.rel (0) target = $region37
    $region36: #{tpu_custom_call.1} parent=1 // pred_region
      %85 = dma.done [#allocation3], 2048
    $region37: #{tpu_custom_call.1} parent=1 // pred_fallthru
      _
    // Predicated region
    $region38: #{tpu_custom_call.1} parent=1 // pred_check
      _
    $region39: #{tpu_custom_call.1} parent=1 // pred_check_branch
      %87 = sbr.rel (0) target = $region41
    $region40: #{tpu_custom_call.1} parent=1 // pred_region
      %88 = dma.done [#allocation6], 4096
    $region41: #{tpu_custom_call.1} parent=1 // pred_fallthru
      _
    // Predicated region
    $region42: #{tpu_custom_call.1} parent=1 // pred_check
      _
    $region43: #{tpu_custom_call.1} parent=1 // pred_check_branch
      %90 = sbr.rel (0) target = $region45
    $region44: #{tpu_custom_call.1} parent=1 // pred_region
      %91 = dma.done [#allocation6], 1024
    $region45: #{tpu_custom_call.1} parent=1 // pred_fallthru
      _
    // Predicated region
    $region46: #{tpu_custom_call.1} parent=1 // pred_check
      _
    $region47: #{tpu_custom_call.1} parent=1 // pred_check_branch
      %93 = sbr.rel (0) target = $region49
    $region48: #{tpu_custom_call.1} parent=1 // pred_region
      %94 = dma.done [#allocation9], 1024
    $region49: #{tpu_custom_call.1} parent=1 // pred_fallthru
      _
    // Predicated region
    $region50: #{tpu_custom_call.1} parent=1 // pred_check
      _
    $region51: #{tpu_custom_call.1} parent=1 // pred_check_branch
      %96 = sbr.rel (0) target = $region53
    $region52: #{tpu_custom_call.1} parent=1 // pred_region
      %97 = dma.done [#allocation9], 1024
    $region53: #{tpu_custom_call.1} parent=1 // pred_fallthru
      _
    %v99 = vld [vmem:[#allocation2] sm:$0xf]
    %v100 = vld [vmem:[#allocation2 + $0x4] sm:$0xf]
    %v101 = vld [vmem:[#allocation2 + $0x8] sm:$0xf]
    %v102 = vld [vmem:[#allocation2 + $0xc] sm:$0xf]
    %v103 = vld [vmem:[#allocation2 + $0x10] sm:$0xf]
    %v104 = vld [vmem:[#allocation2 + $0x14] sm:$0xf]
    %v105 = vld [vmem:[#allocation2 + $0x18] sm:$0xf]
    %v106 = vld [vmem:[#allocation2 + $0x1c] sm:$0xf]
    %v107 = vld [vmem:[#allocation2 + $0x20] sm:$0xf]
    %v108 = vld [vmem:[#allocation2 + $0x24] sm:$0xf]
    %v109 = vld [vmem:[#allocation2 + $0x28] sm:$0xf]
    %v110 = vld [vmem:[#allocation2 + $0x2c] sm:$0xf]
    %v111 = vld [vmem:[#allocation2 + $0x30] sm:$0xf]
    %v112 = vld [vmem:[#allocation2 + $0x34] sm:$0xf]
    %v113 = vld [vmem:[#allocation2 + $0x38] sm:$0xf]
    %v114 = vld [vmem:[#allocation2 + $0x3c] sm:$0xf]
    %v115 = vld [vmem:[#allocation2 + $0x40] sm:$0xf]
    %v116 = vld [vmem:[#allocation2 + $0x44] sm:$0xf]
    %v117 = vld [vmem:[#allocation2 + $0x48] sm:$0xf]
    %v118 = vld [vmem:[#allocation2 + $0x4c] sm:$0xf]
    %v119 = vld [vmem:[#allocation2 + $0x50] sm:$0xf]
    %v120 = vld [vmem:[#allocation2 + $0x54] sm:$0xf]
    %v121 = vld [vmem:[#allocation2 + $0x58] sm:$0xf]
    %v122 = vld [vmem:[#allocation2 + $0x5c] sm:$0xf]
    %v123 = vld [vmem:[#allocation2 + $0x60] sm:$0xf]
    %v124 = vld [vmem:[#allocation2 + $0x64] sm:$0xf]
    %v125 = vld [vmem:[#allocation2 + $0x68] sm:$0xf]
    %v126 = vld [vmem:[#allocation2 + $0x6c] sm:$0xf]
    %v127 = vld [vmem:[#allocation2 + $0x70] sm:$0xf]
    %v128 = vld [vmem:[#allocation2 + $0x74] sm:$0xf]
    %v129 = vld [vmem:[#allocation2 + $0x78] sm:$0xf]
    %v130 = vld [vmem:[#allocation2 + $0x7c] sm:$0xf]
    %v131 = vld [vmem:[#allocation7] sm:$0xf]
    %v132 = vld [vmem:[#allocation7 + $0x4] sm:$0xf]
    %v133 = vld [vmem:[#allocation7 + $0x8] sm:$0xf]
    %v134 = vld [vmem:[#allocation7 + $0xc] sm:$0xf]
    %v135 = vld [vmem:[#allocation7 + $0x10] sm:$0xf]
    %v136 = vld [vmem:[#allocation7 + $0x14] sm:$0xf]
    %v137 = vld [vmem:[#allocation7 + $0x18] sm:$0xf]
    %v138 = vld [vmem:[#allocation7 + $0x1c] sm:$0xf]
    %v139 = vld [vmem:[#allocation7 + $0x20] sm:$0xf]
    %v140 = vld [vmem:[#allocation7 + $0x24] sm:$0xf]
    %v141 = vld [vmem:[#allocation7 + $0x28] sm:$0xf]
    %v142 = vld [vmem:[#allocation7 + $0x2c] sm:$0xf]
    %v143 = vld [vmem:[#allocation7 + $0x30] sm:$0xf]
    %v144 = vld [vmem:[#allocation7 + $0x34] sm:$0xf]
    %v145 = vld [vmem:[#allocation7 + $0x38] sm:$0xf]
    %v146 = vld [vmem:[#allocation7 + $0x3c] sm:$0xf]
    %v147 = vld [vmem:[%s3] sm:$0x1]
    %v149 = vlaneseq
    %v150 = vshrl.u32 %v149, 7
    %v151 = vsub.s32 0, %v150
    %v152 = vrot.slane %v147, %v151
    %v186 = vunpack.c.l.b16 %v99
    %v187 = vunpack.c.l.b16 %v100
    %v188 = vunpack.c.l.b16 %v101
    %v189 = vunpack.c.l.b16 %v102
    %v190 = vunpack.c.l.b16 %v103
    %v191 = vunpack.c.l.b16 %v104
    %v192 = vunpack.c.l.b16 %v105
    %v193 = vunpack.c.l.b16 %v106
    %v194 = vunpack.c.l.b16 %v107
    %v195 = vunpack.c.l.b16 %v108
    %v196 = vunpack.c.l.b16 %v109
    %v197 = vunpack.c.l.b16 %v110
    %v198 = vunpack.c.l.b16 %v111
    %v199 = vunpack.c.l.b16 %v112
    %v200 = vunpack.c.l.b16 %v113
    %v201 = vunpack.c.l.b16 %v114
    %v202 = vunpack.c.l.b16 %v115
    %v203 = vunpack.c.l.b16 %v116
    %v204 = vunpack.c.l.b16 %v117
    %v205 = vunpack.c.l.b16 %v118
    %v206 = vunpack.c.l.b16 %v119
    %v207 = vunpack.c.l.b16 %v120
    %v208 = vunpack.c.l.b16 %v121
    %v209 = vunpack.c.l.b16 %v122
    %v210 = vunpack.c.l.b16 %v123
    %v211 = vunpack.c.l.b16 %v124
    %v212 = vunpack.c.l.b16 %v125
    %v213 = vunpack.c.l.b16 %v126
    %v214 = vunpack.c.l.b16 %v127
    %v215 = vunpack.c.l.b16 %v128
    %v216 = vunpack.c.l.b16 %v129
    %v217 = vunpack.c.l.b16 %v130
    %v218 = vpack.c.b16 %v187, %v186
    %v219 = vpack.c.b16 %v189, %v188
    %v220 = vpack.c.b16 %v191, %v190
    %v221 = vpack.c.b16 %v193, %v192
    %v222 = vpack.c.b16 %v195, %v194
    %v223 = vpack.c.b16 %v197, %v196
    %v224 = vpack.c.b16 %v199, %v198
    %v225 = vpack.c.b16 %v201, %v200
    %v226 = vpack.c.b16 %v203, %v202
    %v227 = vpack.c.b16 %v205, %v204
    %v228 = vpack.c.b16 %v207, %v206
    %v229 = vpack.c.b16 %v209, %v208
    %v230 = vpack.c.b16 %v211, %v210
    %v231 = vpack.c.b16 %v213, %v212
    %v232 = vpack.c.b16 %v215, %v214
    %v233 = vpack.c.b16 %v217, %v216
    %v266 = vunpack.c.l.b16 %v131
    %v267 = vunpack.c.l.b16 %v132
    %v268 = vunpack.c.l.b16 %v133
    %v269 = vunpack.c.l.b16 %v134
    %v270 = vunpack.c.l.b16 %v135
    %v271 = vunpack.c.l.b16 %v136
    %v272 = vunpack.c.l.b16 %v137
    %v273 = vunpack.c.l.b16 %v138
    %v274 = vunpack.c.l.b16 %v139
    %v275 = vunpack.c.l.b16 %v140
    %v276 = vunpack.c.l.b16 %v141
    %v277 = vunpack.c.l.b16 %v142
    %v278 = vunpack.c.l.b16 %v143
    %v279 = vunpack.c.l.b16 %v144
    %v280 = vunpack.c.l.b16 %v145
    %v281 = vunpack.c.l.b16 %v146
    %v282 = vpack.c.b16 %v267, %v266
    %v283 = vpack.c.b16 %v269, %v268
    %v284 = vpack.c.b16 %v271, %v270
    %v285 = vpack.c.b16 %v273, %v272
    %v286 = vpack.c.b16 %v275, %v274
    %v287 = vpack.c.b16 %v277, %v276
    %v288 = vpack.c.b16 %v279, %v278
    %v289 = vpack.c.b16 %v281, %v280
    %298 = vmatprep.subr.bf16.mxu0 0
    %299 = vmatpush1.bf16.msra.mxu0 %v289
    %300 = vmatprep.subr.bf16.mxu0 0
    %301 = vmatpush1.bf16.msra.mxu0 %v288
    %302 = vmatprep.subr.bf16.mxu0 0
    %303 = vmatpush1.bf16.msra.mxu0 %v287
    %304 = vmatprep.subr.bf16.mxu0 0
    %305 = vmatpush1.bf16.msra.mxu0 %v286
    %306 = vmatprep.subr.bf16.mxu0 0
    %307 = vmatpush1.bf16.msra.mxu0 %v285
    %308 = vmatprep.subr.bf16.mxu0 0
    %309 = vmatpush1.bf16.msra.mxu0 %v284
    %310 = vmatprep.subr.bf16.mxu0 0
    %311 = vmatpush1.bf16.msra.mxu0 %v283
    %312 = vmatprep.subr.bf16.mxu0 0
    %313 = vmatpush1.bf16.msra.mxu0 %v282
    %314 = vmatprep.subr.bf16.mxu0 0
    %315 = vmatpush2.bf16.msra.mxu0 0
    %316 = vmatprep.subr.bf16.mxu0 0
    %317 = vmatpush2.bf16.msra.mxu0 0
    %318 = vmatprep.subr.bf16.mxu0 0
    %319 = vmatpush2.bf16.msra.mxu0 0
    %320 = vmatprep.subr.bf16.mxu0 0
    %321 = vmatpush2.bf16.msra.mxu0 0
    %322 = vmatprep.subr.bf16.mxu0 0
    %323 = vmatpush2.bf16.msra.mxu0 0
    %324 = vmatprep.subr.bf16.mxu0 0
    %325 = vmatpush2.bf16.msra.mxu0 0
    %326 = vmatprep.subr.bf16.mxu0 0
    %327 = vmatpush2.bf16.msra.mxu0 0
    %328 = vmatprep.subr.bf16.mxu0 0
    %329 = vmatpush2.bf16.msra.mxu0 0
    %330 = vmatprep.mubr.bf16.mxu0 0
    %331 = vmatmul.mubr.bf16.gmra.mxu0 %v218
    %v332 = vpop.f32.mrf.mxu0
    %v333 = vadd.f32 %v152, %v332
    %v334 = vpop.f32.mrf.mxu0
    %v335 = vpop.f32.mrf.mxu0
    %v336 = vadd.f32 %v152, %v335
    %v337 = vpop.f32.mrf.mxu0
    %338 = vmatprep.mubr.bf16.mxu0 0
    %339 = vmatmul.mubr.bf16.gmra.mxu0 %v219
    %v340 = vpop.f32.mrf.mxu0
    %v341 = vadd.f32 %v152, %v340
    %v342 = vpop.f32.mrf.mxu0
    %v343 = vpop.f32.mrf.mxu0
    %v344 = vadd.f32 %v152, %v343
    %v345 = vpop.f32.mrf.mxu0
    %346 = vmatprep.mubr.bf16.mxu0 0
    %347 = vmatmul.mubr.bf16.gmra.mxu0 %v220
    %v348 = vpop.f32.mrf.mxu0
    %v349 = vadd.f32 %v152, %v348
    %v350 = vpop.f32.mrf.mxu0
    %v351 = vpop.f32.mrf.mxu0
    %v352 = vadd.f32 %v152, %v351
    %v353 = vpop.f32.mrf.mxu0
    %354 = vmatprep.mubr.bf16.mxu0 0
    %355 = vmatmul.mubr.bf16.gmra.mxu0 %v221
    %v356 = vpop.f32.mrf.mxu0
    %v357 = vadd.f32 %v152, %v356
    %v358 = vpop.f32.mrf.mxu0
    %v359 = vpop.f32.mrf.mxu0
    %v360 = vadd.f32 %v152, %v359
    %v361 = vpop.f32.mrf.mxu0
    %362 = vmatprep.mubr.bf16.mxu0 0
    %363 = vmatmul.mubr.bf16.gmra.mxu0 %v222
    %v364 = vpop.f32.mrf.mxu0
    %v365 = vadd.f32 %v152, %v364
    %v366 = vpop.f32.mrf.mxu0
    %v367 = vpop.f32.mrf.mxu0
    %v368 = vadd.f32 %v152, %v367
    %v369 = vpop.f32.mrf.mxu0
    %370 = vmatprep.mubr.bf16.mxu0 0
    %371 = vmatmul.mubr.bf16.gmra.mxu0 %v223
    %v372 = vpop.f32.mrf.mxu0
    %v373 = vadd.f32 %v152, %v372
    %v374 = vpop.f32.mrf.mxu0
    %v375 = vpop.f32.mrf.mxu0
    %v376 = vadd.f32 %v152, %v375
    %v377 = vpop.f32.mrf.mxu0
    %378 = vmatprep.mubr.bf16.mxu0 0
    %379 = vmatmul.mubr.bf16.gmra.mxu0 %v224
    %v380 = vpop.f32.mrf.mxu0
    %v381 = vadd.f32 %v152, %v380
    %v382 = vpop.f32.mrf.mxu0
    %v383 = vpop.f32.mrf.mxu0
    %v384 = vadd.f32 %v152, %v383
    %v385 = vpop.f32.mrf.mxu0
    %386 = vmatprep.mubr.bf16.mxu0 0
    %387 = vmatmul.mubr.bf16.gmra.mxu0 %v225
    %v388 = vpop.f32.mrf.mxu0
    %v389 = vadd.f32 %v152, %v388
    %v390 = vpop.f32.mrf.mxu0
    %v391 = vpop.f32.mrf.mxu0
    %v392 = vadd.f32 %v152, %v391
    %v393 = vpop.f32.mrf.mxu0
    %394 = vmatprep.mubr.bf16.mxu0 0
    %395 = vmatmul.mubr.bf16.gmra.mxu0 %v226
    %v396 = vpop.f32.mrf.mxu0
    %v397 = vadd.f32 %v152, %v396
    %v398 = vpop.f32.mrf.mxu0
    %v399 = vpop.f32.mrf.mxu0
    %v400 = vadd.f32 %v152, %v399
    %v401 = vpop.f32.mrf.mxu0
    %402 = vmatprep.mubr.bf16.mxu0 0
    %403 = vmatmul.mubr.bf16.gmra.mxu0 %v227
    %v404 = vpop.f32.mrf.mxu0
    %v405 = vadd.f32 %v152, %v404
    %v406 = vpop.f32.mrf.mxu0
    %v407 = vpop.f32.mrf.mxu0
    %v408 = vadd.f32 %v152, %v407
    %v409 = vpop.f32.mrf.mxu0
    %410 = vmatprep.mubr.bf16.mxu0 0
    %411 = vmatmul.mubr.bf16.gmra.mxu0 %v228
    %v412 = vpop.f32.mrf.mxu0
    %v413 = vadd.f32 %v152, %v412
    %v414 = vpop.f32.mrf.mxu0
    %v415 = vpop.f32.mrf.mxu0
    %v416 = vadd.f32 %v152, %v415
    %v417 = vpop.f32.mrf.mxu0
    %418 = vmatprep.mubr.bf16.mxu0 0
    %419 = vmatmul.mubr.bf16.gmra.mxu0 %v229
    %v420 = vpop.f32.mrf.mxu0
    %v421 = vadd.f32 %v152, %v420
    %v422 = vpop.f32.mrf.mxu0
    %v423 = vpop.f32.mrf.mxu0
    %v424 = vadd.f32 %v152, %v423
    %v425 = vpop.f32.mrf.mxu0
    %426 = vmatprep.mubr.bf16.mxu0 0
    %427 = vmatmul.mubr.bf16.gmra.mxu0 %v230
    %v428 = vpop.f32.mrf.mxu0
    %v429 = vadd.f32 %v152, %v428
    %v430 = vpop.f32.mrf.mxu0
    %v431 = vpop.f32.mrf.mxu0
    %v432 = vadd.f32 %v152, %v431
    %v433 = vpop.f32.mrf.mxu0
    %434 = vmatprep.mubr.bf16.mxu0 0
    %435 = vmatmul.mubr.bf16.gmra.mxu0 %v231
    %v436 = vpop.f32.mrf.mxu0
    %v437 = vadd.f32 %v152, %v436
    %v438 = vpop.f32.mrf.mxu0
    %v439 = vpop.f32.mrf.mxu0
    %v440 = vadd.f32 %v152, %v439
    %v441 = vpop.f32.mrf.mxu0
    %442 = vmatprep.mubr.bf16.mxu0 0
    %443 = vmatmul.mubr.bf16.gmra.mxu0 %v232
    %v444 = vpop.f32.mrf.mxu0
    %v445 = vadd.f32 %v152, %v444
    %v446 = vpop.f32.mrf.mxu0
    %v447 = vpop.f32.mrf.mxu0
    %v448 = vadd.f32 %v152, %v447
    %v449 = vpop.f32.mrf.mxu0
    %450 = vmatprep.mubr.bf16.mxu0 0
    %451 = vmatmul.mubr.bf16.gmra.mxu0 %v233
    %v452 = vpop.f32.mrf.mxu0
    %v453 = vadd.f32 %v152, %v452
    %v454 = vpop.f32.mrf.mxu0
    %v455 = vpop.f32.mrf.mxu0
    %v456 = vadd.f32 %v152, %v455
    %v457 = vpop.f32.mrf.mxu0
    %458 = vdwg.mxu0
    %v459 = vmax.f32 %v333, 0.0
    %v460 = vmax.f32 %v336, 0.0
    %v461 = vmax.f32 %v341, 0.0
    %v462 = vmax.f32 %v344, 0.0
    %v463 = vmax.f32 %v349, 0.0
    %v464 = vmax.f32 %v352, 0.0
    %v465 = vmax.f32 %v357, 0.0
    %v466 = vmax.f32 %v360, 0.0
    %v467 = vmax.f32 %v365, 0.0
    %v468 = vmax.f32 %v368, 0.0
    %v469 = vmax.f32 %v373, 0.0
    %v470 = vmax.f32 %v376, 0.0
    %v471 = vmax.f32 %v381, 0.0
    %v472 = vmax.f32 %v384, 0.0
    %v473 = vmax.f32 %v389, 0.0
    %v474 = vmax.f32 %v392, 0.0
    %v475 = vmax.f32 %v397, 0.0
    %v476 = vmax.f32 %v400, 0.0
    %v477 = vmax.f32 %v405, 0.0
    %v478 = vmax.f32 %v408, 0.0
    %v479 = vmax.f32 %v413, 0.0
    %v480 = vmax.f32 %v416, 0.0
    %v481 = vmax.f32 %v421, 0.0
    %v482 = vmax.f32 %v424, 0.0
    %v483 = vmax.f32 %v429, 0.0
    %v484 = vmax.f32 %v432, 0.0
    %v485 = vmax.f32 %v437, 0.0
    %v486 = vmax.f32 %v440, 0.0
    %v487 = vmax.f32 %v445, 0.0
    %v488 = vmax.f32 %v448, 0.0
    %v489 = vmax.f32 %v453, 0.0
    %v490 = vmax.f32 %v456, 0.0
    %v491 = vpack.c.bf16 %v460, %v459
    %v492 = vpack.c.bf16 %v462, %v461
    %v493 = vpack.c.bf16 %v464, %v463
    %v494 = vpack.c.bf16 %v466, %v465
    %v495 = vpack.c.bf16 %v468, %v467
    %v496 = vpack.c.bf16 %v470, %v469
    %v497 = vpack.c.bf16 %v472, %v471
    %v498 = vpack.c.bf16 %v474, %v473
    %v499 = vpack.c.bf16 %v476, %v475
    %v500 = vpack.c.bf16 %v478, %v477
    %v501 = vpack.c.bf16 %v480, %v479
    %v502 = vpack.c.bf16 %v482, %v481
    %v503 = vpack.c.bf16 %v484, %v483
    %v504 = vpack.c.bf16 %v486, %v485
    %v505 = vpack.c.bf16 %v488, %v487
    %v506 = vpack.c.bf16 %v490, %v489
    %v507 = vld [vmem:[#allocation8] sm:$0xf]
    %v508 = vld [vmem:[#allocation8 + $0x4] sm:$0xf]
    %v509 = vld [vmem:[#allocation8 + $0x8] sm:$0xf]
    %v510 = vld [vmem:[#allocation8 + $0xc] sm:$0xf]
    %v511 = vld [vmem:[#allocation8 + $0x10] sm:$0xf]
    %v512 = vld [vmem:[#allocation8 + $0x14] sm:$0xf]
    %v513 = vld [vmem:[#allocation8 + $0x18] sm:$0xf]
    %v514 = vld [vmem:[#allocation8 + $0x1c] sm:$0xf]
    %v515 = vld [vmem:[#allocation8 + $0x20] sm:$0xf]
    %v516 = vld [vmem:[#allocation8 + $0x24] sm:$0xf]
    %v517 = vld [vmem:[#allocation8 + $0x28] sm:$0xf]
    %v518 = vld [vmem:[#allocation8 + $0x2c] sm:$0xf]
    %v519 = vld [vmem:[#allocation8 + $0x30] sm:$0xf]
    %v520 = vld [vmem:[#allocation8 + $0x34] sm:$0xf]
    %v521 = vld [vmem:[#allocation8 + $0x38] sm:$0xf]
    %v522 = vld [vmem:[#allocation8 + $0x3c] sm:$0xf]
    %v539 = vunpack.c.l.b16 %v507
    %v540 = vunpack.c.l.b16 %v508
    %v541 = vunpack.c.l.b16 %v509
    %v542 = vunpack.c.l.b16 %v510
    %v543 = vunpack.c.l.b16 %v511
    %v544 = vunpack.c.l.b16 %v512
    %v545 = vunpack.c.l.b16 %v513
    %v546 = vunpack.c.l.b16 %v514
    %v547 = vunpack.c.l.b16 %v515
    %v548 = vunpack.c.l.b16 %v516
    %v549 = vunpack.c.l.b16 %v517
    %v550 = vunpack.c.l.b16 %v518
    %v551 = vunpack.c.l.b16 %v519
    %v552 = vunpack.c.l.b16 %v520
    %v553 = vunpack.c.l.b16 %v521
    %v554 = vunpack.c.l.b16 %v522
    %v555 = vpack.c.b16 %v540, %v539
    %v556 = vpack.c.b16 %v542, %v541
    %v557 = vpack.c.b16 %v544, %v543
    %v558 = vpack.c.b16 %v546, %v545
    %v559 = vpack.c.b16 %v548, %v547
    %v560 = vpack.c.b16 %v550, %v549
    %v561 = vpack.c.b16 %v552, %v551
    %v562 = vpack.c.b16 %v554, %v553
    %571 = vmatprep.subr.bf16.mxu0 0
    %572 = vmatpush1.bf16.msra.mxu0 %v562
    %573 = vmatprep.subr.bf16.mxu0 0
    %574 = vmatpush1.bf16.msra.mxu0 %v561
    %575 = vmatprep.subr.bf16.mxu0 0
    %576 = vmatpush1.bf16.msra.mxu0 %v560
    %577 = vmatprep.subr.bf16.mxu0 0
    %578 = vmatpush1.bf16.msra.mxu0 %v559
    %579 = vmatprep.subr.bf16.mxu0 0
    %580 = vmatpush1.bf16.msra.mxu0 %v558
    %581 = vmatprep.subr.bf16.mxu0 0
    %582 = vmatpush1.bf16.msra.mxu0 %v557
    %583 = vmatprep.subr.bf16.mxu0 0
    %584 = vmatpush1.bf16.msra.mxu0 %v556
    %585 = vmatprep.subr.bf16.mxu0 0
    %586 = vmatpush1.bf16.msra.mxu0 %v555
    %587 = vmatprep.subr.bf16.mxu0 0
    %588 = vmatpush2.bf16.msra.mxu0 0
    %589 = vmatprep.subr.bf16.mxu0 0
    %590 = vmatpush2.bf16.msra.mxu0 0
    %591 = vmatprep.subr.bf16.mxu0 0
    %592 = vmatpush2.bf16.msra.mxu0 0
    %593 = vmatprep.subr.bf16.mxu0 0
    %594 = vmatpush2.bf16.msra.mxu0 0
    %595 = vmatprep.subr.bf16.mxu0 0
    %596 = vmatpush2.bf16.msra.mxu0 0
    %597 = vmatprep.subr.bf16.mxu0 0
    %598 = vmatpush2.bf16.msra.mxu0 0
    %599 = vmatprep.subr.bf16.mxu0 0
    %600 = vmatpush2.bf16.msra.mxu0 0
    %601 = vmatprep.subr.bf16.mxu0 0
    %602 = vmatpush2.bf16.msra.mxu0 0
    %603 = vmatprep.mubr.bf16.mxu0 0
    %604 = vmatmul.mubr.bf16.gmra.mxu0 %v491
    %v605 = vpop.f32.mrf.mxu0
    %v606 = vadd.f32 0.0, %v605
    %v607 = vpop.f32.mrf.mxu0
    %v608 = vpop.f32.mrf.mxu0
    %v609 = vadd.f32 0.0, %v608
    %v610 = vpop.f32.mrf.mxu0
    %611 = vmatprep.mubr.bf16.mxu0 0
    %612 = vmatmul.mubr.bf16.gmra.mxu0 %v492
    %v613 = vpop.f32.mrf.mxu0
    %v614 = vadd.f32 0.0, %v613
    %v615 = vpop.f32.mrf.mxu0
    %v616 = vpop.f32.mrf.mxu0
    %v617 = vadd.f32 0.0, %v616
    %v618 = vpop.f32.mrf.mxu0
    %619 = vmatprep.mubr.bf16.mxu0 0
    %620 = vmatmul.mubr.bf16.gmra.mxu0 %v493
    %v621 = vpop.f32.mrf.mxu0
    %v622 = vadd.f32 0.0, %v621
    %v623 = vpop.f32.mrf.mxu0
    %v624 = vpop.f32.mrf.mxu0
    %v625 = vadd.f32 0.0, %v624
    %v626 = vpop.f32.mrf.mxu0
    %627 = vmatprep.mubr.bf16.mxu0 0
    %628 = vmatmul.mubr.bf16.gmra.mxu0 %v494
    %v629 = vpop.f32.mrf.mxu0
    %v630 = vadd.f32 0.0, %v629
    %v631 = vpop.f32.mrf.mxu0
    %v632 = vpop.f32.mrf.mxu0
    %v633 = vadd.f32 0.0, %v632
    %v634 = vpop.f32.mrf.mxu0
    %635 = vmatprep.mubr.bf16.mxu0 0
    %636 = vmatmul.mubr.bf16.gmra.mxu0 %v495
    %v637 = vpop.f32.mrf.mxu0
    %v638 = vadd.f32 0.0, %v637
    %v639 = vpop.f32.mrf.mxu0
    %v640 = vpop.f32.mrf.mxu0
    %v641 = vadd.f32 0.0, %v640
    %v642 = vpop.f32.mrf.mxu0
    %643 = vmatprep.mubr.bf16.mxu0 0
    %644 = vmatmul.mubr.bf16.gmra.mxu0 %v496
    %v645 = vpop.f32.mrf.mxu0
    %v646 = vadd.f32 0.0, %v645
    %v647 = vpop.f32.mrf.mxu0
    %v648 = vpop.f32.mrf.mxu0
    %v649 = vadd.f32 0.0, %v648
    %v650 = vpop.f32.mrf.mxu0
    %651 = vmatprep.mubr.bf16.mxu0 0
    %652 = vmatmul.mubr.bf16.gmra.mxu0 %v497
    %v653 = vpop.f32.mrf.mxu0
    %v654 = vadd.f32 0.0, %v653
    %v655 = vpop.f32.mrf.mxu0
    %v656 = vpop.f32.mrf.mxu0
    %v657 = vadd.f32 0.0, %v656
    %v658 = vpop.f32.mrf.mxu0
    %659 = vmatprep.mubr.bf16.mxu0 0
    %660 = vmatmul.mubr.bf16.gmra.mxu0 %v498
    %v661 = vpop.f32.mrf.mxu0
    %v662 = vadd.f32 0.0, %v661
    %v663 = vpop.f32.mrf.mxu0
    %v664 = vpop.f32.mrf.mxu0
    %v665 = vadd.f32 0.0, %v664
    %v666 = vpop.f32.mrf.mxu0
    %667 = vmatprep.mubr.bf16.mxu0 0
    %668 = vmatmul.mubr.bf16.gmra.mxu0 %v499
    %v669 = vpop.f32.mrf.mxu0
    %v670 = vadd.f32 0.0, %v669
    %v671 = vpop.f32.mrf.mxu0
    %v672 = vpop.f32.mrf.mxu0
    %v673 = vadd.f32 0.0, %v672
    %v674 = vpop.f32.mrf.mxu0
    %675 = vmatprep.mubr.bf16.mxu0 0
    %676 = vmatmul.mubr.bf16.gmra.mxu0 %v500
    %v677 = vpop.f32.mrf.mxu0
    %v678 = vadd.f32 0.0, %v677
    %v679 = vpop.f32.mrf.mxu0
    %v680 = vpop.f32.mrf.mxu0
    %v681 = vadd.f32 0.0, %v680
    %v682 = vpop.f32.mrf.mxu0
    %683 = vmatprep.mubr.bf16.mxu0 0
    %684 = vmatmul.mubr.bf16.gmra.mxu0 %v501
    %v685 = vpop.f32.mrf.mxu0
    %v686 = vadd.f32 0.0, %v685
    %v687 = vpop.f32.mrf.mxu0
    %v688 = vpop.f32.mrf.mxu0
    %v689 = vadd.f32 0.0, %v688
    %v690 = vpop.f32.mrf.mxu0
    %691 = vmatprep.mubr.bf16.mxu0 0
    %692 = vmatmul.mubr.bf16.gmra.mxu0 %v502
    %v693 = vpop.f32.mrf.mxu0
    %v694 = vadd.f32 0.0, %v693
    %v695 = vpop.f32.mrf.mxu0
    %v696 = vpop.f32.mrf.mxu0
    %v697 = vadd.f32 0.0, %v696
    %v698 = vpop.f32.mrf.mxu0
    %699 = vmatprep.mubr.bf16.mxu0 0
    %700 = vmatmul.mubr.bf16.gmra.mxu0 %v503
    %v701 = vpop.f32.mrf.mxu0
    %v702 = vadd.f32 0.0, %v701
    %v703 = vpop.f32.mrf.mxu0
    %v704 = vpop.f32.mrf.mxu0
    %v705 = vadd.f32 0.0, %v704
    %v706 = vpop.f32.mrf.mxu0
    %707 = vmatprep.mubr.bf16.mxu0 0
    %708 = vmatmul.mubr.bf16.gmra.mxu0 %v504
    %v709 = vpop.f32.mrf.mxu0
    %v710 = vadd.f32 0.0, %v709
    %v711 = vpop.f32.mrf.mxu0
    %v712 = vpop.f32.mrf.mxu0
    %v713 = vadd.f32 0.0, %v712
    %v714 = vpop.f32.mrf.mxu0
    %715 = vmatprep.mubr.bf16.mxu0 0
    %716 = vmatmul.mubr.bf16.gmra.mxu0 %v505
    %v717 = vpop.f32.mrf.mxu0
    %v718 = vadd.f32 0.0, %v717
    %v719 = vpop.f32.mrf.mxu0
    %v720 = vpop.f32.mrf.mxu0
    %v721 = vadd.f32 0.0, %v720
    %v722 = vpop.f32.mrf.mxu0
    %723 = vmatprep.mubr.bf16.mxu0 0
    %724 = vmatmul.mubr.bf16.gmra.mxu0 %v506
    %v725 = vpop.f32.mrf.mxu0
    %v726 = vadd.f32 0.0, %v725
    %v727 = vpop.f32.mrf.mxu0
    %v728 = vpop.f32.mrf.mxu0
    %v729 = vadd.f32 0.0, %v728
    %v730 = vpop.f32.mrf.mxu0
    %731 = vdwg.mxu0
    %v732 = vpack.c.bf16 %v609, %v606
    %v733 = vpack.c.bf16 %v617, %v614
    %v734 = vpack.c.bf16 %v625, %v622
    %v735 = vpack.c.bf16 %v633, %v630
    %v736 = vpack.c.bf16 %v641, %v638
    %v737 = vpack.c.bf16 %v649, %v646
    %v738 = vpack.c.bf16 %v657, %v654
    %v739 = vpack.c.bf16 %v665, %v662
    %v740 = vpack.c.bf16 %v673, %v670
    %v741 = vpack.c.bf16 %v681, %v678
    %v742 = vpack.c.bf16 %v689, %v686
    %v743 = vpack.c.bf16 %v697, %v694
    %v744 = vpack.c.bf16 %v705, %v702
    %v745 = vpack.c.bf16 %v713, %v710
    %v746 = vpack.c.bf16 %v721, %v718
    %v747 = vpack.c.bf16 %v729, %v726
    %v748 = vld [vmem:[#allocation5] sm:$0xff]
    %v749 = vld [vmem:[#allocation5 + $0x8] sm:$0xff]
    %v750 = vld [vmem:[#allocation5 + $0x10] sm:$0xff]
    %v751 = vld [vmem:[#allocation5 + $0x18] sm:$0xff]
    %v752 = vld [vmem:[#allocation5 + $0x20] sm:$0xff]
    %v753 = vld [vmem:[#allocation5 + $0x28] sm:$0xff]
    %v754 = vld [vmem:[#allocation5 + $0x30] sm:$0xff]
    %v755 = vld [vmem:[#allocation5 + $0x38] sm:$0xff]
    %v756 = vld [vmem:[#allocation5 + $0x40] sm:$0xff]
    %v757 = vld [vmem:[#allocation5 + $0x48] sm:$0xff]
    %v758 = vld [vmem:[#allocation5 + $0x50] sm:$0xff]
    %v759 = vld [vmem:[#allocation5 + $0x58] sm:$0xff]
    %v760 = vld [vmem:[#allocation5 + $0x60] sm:$0xff]
    %v761 = vld [vmem:[#allocation5 + $0x68] sm:$0xff]
    %v762 = vld [vmem:[#allocation5 + $0x70] sm:$0xff]
    %v763 = vld [vmem:[#allocation5 + $0x78] sm:$0xff]
    %v764 = vld [vmem:[#allocation5 + $0x80] sm:$0xff]
    %v765 = vld [vmem:[#allocation5 + $0x88] sm:$0xff]
    %v766 = vld [vmem:[#allocation5 + $0x90] sm:$0xff]
    %v767 = vld [vmem:[#allocation5 + $0x98] sm:$0xff]
    %v768 = vld [vmem:[#allocation5 + $0xa0] sm:$0xff]
    %v769 = vld [vmem:[#allocation5 + $0xa8] sm:$0xff]
    %v770 = vld [vmem:[#allocation5 + $0xb0] sm:$0xff]
    %v771 = vld [vmem:[#allocation5 + $0xb8] sm:$0xff]
    %v772 = vld [vmem:[#allocation5 + $0xc0] sm:$0xff]
    %v773 = vld [vmem:[#allocation5 + $0xc8] sm:$0xff]
    %v774 = vld [vmem:[#allocation5 + $0xd0] sm:$0xff]
    %v775 = vld [vmem:[#allocation5 + $0xd8] sm:$0xff]
    %v776 = vld [vmem:[#allocation5 + $0xe0] sm:$0xff]
    %v777 = vld [vmem:[#allocation5 + $0xe8] sm:$0xff]
    %v778 = vld [vmem:[#allocation5 + $0xf0] sm:$0xff]
    %v779 = vld [vmem:[#allocation5 + $0xf8] sm:$0xff]
    %v780 = vld [vmem:[%s5] sm:$0x1]
    %v782 = vlaneseq
    %v783 = vshrl.u32 %v782, 7
    %v784 = vsub.s32 0, %v783
    %v785 = vrot.slane %v780, %v784
    %v819 = vunpack.c.l.b16 %v748
    %v820 = vunpack.c.h.b16 %v748
    %v821 = vunpack.c.l.b16 %v749
    %v822 = vunpack.c.h.b16 %v749
    %v823 = vunpack.c.l.b16 %v750
    %v824 = vunpack.c.h.b16 %v750
    %v825 = vunpack.c.l.b16 %v751
    %v826 = vunpack.c.h.b16 %v751
    %v827 = vunpack.c.l.b16 %v752
    %v828 = vunpack.c.h.b16 %v752
    %v829 = vunpack.c.l.b16 %v753
    %v830 = vunpack.c.h.b16 %v753
    %v831 = vunpack.c.l.b16 %v754
    %v832 = vunpack.c.h.b16 %v754
    %v833 = vunpack.c.l.b16 %v755
    %v834 = vunpack.c.h.b16 %v755
    %v835 = vunpack.c.l.b16 %v756
    %v836 = vunpack.c.h.b16 %v756
    %v837 = vunpack.c.l.b16 %v757
    %v838 = vunpack.c.h.b16 %v757
    %v839 = vunpack.c.l.b16 %v758
    %v840 = vunpack.c.h.b16 %v758
    %v841 = vunpack.c.l.b16 %v759
    %v842 = vunpack.c.h.b16 %v759
    %v843 = vunpack.c.l.b16 %v760
    %v844 = vunpack.c.h.b16 %v760
    %v845 = vunpack.c.l.b16 %v761
    %v846 = vunpack.c.h.b16 %v761
    %v847 = vunpack.c.l.b16 %v762
    %v848 = vunpack.c.h.b16 %v762
    %v849 = vunpack.c.l.b16 %v763
    %v850 = vunpack.c.h.b16 %v763
    %v851 = vunpack.c.l.b16 %v764
    %v852 = vunpack.c.h.b16 %v764
    %v853 = vunpack.c.l.b16 %v765
    %v854 = vunpack.c.h.b16 %v765
    %v855 = vunpack.c.l.b16 %v766
    %v856 = vunpack.c.h.b16 %v766
    %v857 = vunpack.c.l.b16 %v767
    %v858 = vunpack.c.h.b16 %v767
    %v859 = vunpack.c.l.b16 %v768
    %v860 = vunpack.c.h.b16 %v768
    %v861 = vunpack.c.l.b16 %v769
    %v862 = vunpack.c.h.b16 %v769
    %v863 = vunpack.c.l.b16 %v770
    %v864 = vunpack.c.h.b16 %v770
    %v865 = vunpack.c.l.b16 %v771
    %v866 = vunpack.c.h.b16 %v771
    %v867 = vunpack.c.l.b16 %v772
    %v868 = vunpack.c.h.b16 %v772
    %v869 = vunpack.c.l.b16 %v773
    %v870 = vunpack.c.h.b16 %v773
    %v871 = vunpack.c.l.b16 %v774
    %v872 = vunpack.c.h.b16 %v774
    %v873 = vunpack.c.l.b16 %v775
    %v874 = vunpack.c.h.b16 %v775
    %v875 = vunpack.c.l.b16 %v776
    %v876 = vunpack.c.h.b16 %v776
    %v877 = vunpack.c.l.b16 %v777
    %v878 = vunpack.c.h.b16 %v777
    %v879 = vunpack.c.l.b16 %v778
    %v880 = vunpack.c.h.b16 %v778
    %v881 = vunpack.c.l.b16 %v779
    %v882 = vunpack.c.h.b16 %v779
    %v883 = vpack.c.b16 %v821, %v819
    %v884 = vpack.c.b16 %v822, %v820
    %v885 = vpack.c.b16 %v825, %v823
    %v886 = vpack.c.b16 %v826, %v824
    %v887 = vpack.c.b16 %v829, %v827
    %v888 = vpack.c.b16 %v830, %v828
    %v889 = vpack.c.b16 %v833, %v831
    %v890 = vpack.c.b16 %v834, %v832
    %v891 = vpack.c.b16 %v837, %v835
    %v892 = vpack.c.b16 %v838, %v836
    %v893 = vpack.c.b16 %v841, %v839
    %v894 = vpack.c.b16 %v842, %v840
    %v895 = vpack.c.b16 %v845, %v843
    %v896 = vpack.c.b16 %v846, %v844
    %v897 = vpack.c.b16 %v849, %v847
    %v898 = vpack.c.b16 %v850, %v848
    %v899 = vpack.c.b16 %v853, %v851
    %v900 = vpack.c.b16 %v854, %v852
    %v901 = vpack.c.b16 %v857, %v855
    %v902 = vpack.c.b16 %v858, %v856
    %v903 = vpack.c.b16 %v861, %v859
    %v904 = vpack.c.b16 %v862, %v860
    %v905 = vpack.c.b16 %v865, %v863
    %v906 = vpack.c.b16 %v866, %v864
    %v907 = vpack.c.b16 %v869, %v867
    %v908 = vpack.c.b16 %v870, %v868
    %v909 = vpack.c.b16 %v873, %v871
    %v910 = vpack.c.b16 %v874, %v872
    %v911 = vpack.c.b16 %v877, %v875
    %v912 = vpack.c.b16 %v878, %v876
    %v913 = vpack.c.b16 %v881, %v879
    %v914 = vpack.c.b16 %v882, %v880
    %947 = vmatprep.subr.bf16.mxu0 0
    %948 = vmatpush1.bf16.msra.mxu0 %v739
    %949 = vmatprep.subr.bf16.mxu0 0
    %950 = vmatpush1.bf16.msra.mxu0 %v738
    %951 = vmatprep.subr.bf16.mxu0 0
    %952 = vmatpush1.bf16.msra.mxu0 %v737
    %953 = vmatprep.subr.bf16.mxu0 0
    %954 = vmatpush1.bf16.msra.mxu0 %v736
    %955 = vmatprep.subr.bf16.mxu0 0
    %956 = vmatpush1.bf16.msra.mxu0 %v735
    %957 = vmatprep.subr.bf16.mxu0 0
    %958 = vmatpush1.bf16.msra.mxu0 %v734
    %959 = vmatprep.subr.bf16.mxu0 0
    %960 = vmatpush1.bf16.msra.mxu0 %v733
    %961 = vmatprep.subr.bf16.mxu0 0
    %962 = vmatpush1.bf16.msra.mxu0 %v732
    %963 = vmatprep.subr.bf16.mxu0 0
    %964 = vmatpush2.bf16.msra.mxu0 %v747
    %965 = vmatprep.subr.bf16.mxu0 0
    %966 = vmatpush2.bf16.msra.mxu0 %v746
    %967 = vmatprep.subr.bf16.mxu0 0
    %968 = vmatpush2.bf16.msra.mxu0 %v745
    %969 = vmatprep.subr.bf16.mxu0 0
    %970 = vmatpush2.bf16.msra.mxu0 %v744
    %971 = vmatprep.subr.bf16.mxu0 0
    %972 = vmatpush2.bf16.msra.mxu0 %v743
    %973 = vmatprep.subr.bf16.mxu0 0
    %974 = vmatpush2.bf16.msra.mxu0 %v742
    %975 = vmatprep.subr.bf16.mxu0 0
    %976 = vmatpush2.bf16.msra.mxu0 %v741
    %977 = vmatprep.subr.bf16.mxu0 0
    %978 = vmatpush2.bf16.msra.mxu0 %v740
    %979 = vmatprep.mubr.bf16.mxu0 %v884
    %980 = vmatmul.mubr.bf16.gmra.mxu0 %v883
    %v981 = vpop.f32.mrf.mxu0
    %v982 = vadd.f32 %v785, %v981
    %v983 = vpop.f32.mrf.mxu0
    %v984 = vpop.f32.mrf.mxu0
    %v985 = vadd.f32 %v785, %v984
    %v986 = vpop.f32.mrf.mxu0
    %987 = vmatprep.mubr.bf16.mxu0 %v886
    %988 = vmatmul.mubr.bf16.gmra.mxu0 %v885
    %v989 = vpop.f32.mrf.mxu0
    %v990 = vadd.f32 %v785, %v989
    %v991 = vpop.f32.mrf.mxu0
    %v992 = vpop.f32.mrf.mxu0
    %v993 = vadd.f32 %v785, %v992
    %v994 = vpop.f32.mrf.mxu0
    %995 = vmatprep.mubr.bf16.mxu0 %v888
    %996 = vmatmul.mubr.bf16.gmra.mxu0 %v887
    %v997 = vpop.f32.mrf.mxu0
    %v998 = vadd.f32 %v785, %v997
    %v999 = vpop.f32.mrf.mxu0
    %v1000 = vpop.f32.mrf.mxu0
    %v1001 = vadd.f32 %v785, %v1000
    %v1002 = vpop.f32.mrf.mxu0
    %1003 = vmatprep.mubr.bf16.mxu0 %v890
    %1004 = vmatmul.mubr.bf16.gmra.mxu0 %v889
    %v1005 = vpop.f32.mrf.mxu0
    %v1006 = vadd.f32 %v785, %v1005
    %v1007 = vpop.f32.mrf.mxu0
    %v1008 = vpop.f32.mrf.mxu0
    %v1009 = vadd.f32 %v785, %v1008
    %v1010 = vpop.f32.mrf.mxu0
    %1011 = vmatprep.mubr.bf16.mxu0 %v892
    %1012 = vmatmul.mubr.bf16.gmra.mxu0 %v891
    %v1013 = vpop.f32.mrf.mxu0
    %v1014 = vadd.f32 %v785, %v1013
    %v1015 = vpop.f32.mrf.mxu0
    %v1016 = vpop.f32.mrf.mxu0
    %v1017 = vadd.f32 %v785, %v1016
    %v1018 = vpop.f32.mrf.mxu0
    %1019 = vmatprep.mubr.bf16.mxu0 %v894
    %1020 = vmatmul.mubr.bf16.gmra.mxu0 %v893
    %v1021 = vpop.f32.mrf.mxu0
    %v1022 = vadd.f32 %v785, %v1021
    %v1023 = vpop.f32.mrf.mxu0
    %v1024 = vpop.f32.mrf.mxu0
    %v1025 = vadd.f32 %v785, %v1024
    %v1026 = vpop.f32.mrf.mxu0
    %1027 = vmatprep.mubr.bf16.mxu0 %v896
    %1028 = vmatmul.mubr.bf16.gmra.mxu0 %v895
    %v1029 = vpop.f32.mrf.mxu0
    %v1030 = vadd.f32 %v785, %v1029
    %v1031 = vpop.f32.mrf.mxu0
    %v1032 = vpop.f32.mrf.mxu0
    %v1033 = vadd.f32 %v785, %v1032
    %v1034 = vpop.f32.mrf.mxu0
    %1035 = vmatprep.mubr.bf16.mxu0 %v898
    %1036 = vmatmul.mubr.bf16.gmra.mxu0 %v897
    %v1037 = vpop.f32.mrf.mxu0
    %v1038 = vadd.f32 %v785, %v1037
    %v1039 = vpop.f32.mrf.mxu0
    %v1040 = vpop.f32.mrf.mxu0
    %v1041 = vadd.f32 %v785, %v1040
    %v1042 = vpop.f32.mrf.mxu0
    %1043 = vmatprep.mubr.bf16.mxu0 %v900
    %1044 = vmatmul.mubr.bf16.gmra.mxu0 %v899
    %v1045 = vpop.f32.mrf.mxu0
    %v1046 = vadd.f32 %v785, %v1045
    %v1047 = vpop.f32.mrf.mxu0
    %v1048 = vpop.f32.mrf.mxu0
    %v1049 = vadd.f32 %v785, %v1048
    %v1050 = vpop.f32.mrf.mxu0
    %1051 = vmatprep.mubr.bf16.mxu0 %v902
    %1052 = vmatmul.mubr.bf16.gmra.mxu0 %v901
    %v1053 = vpop.f32.mrf.mxu0
    %v1054 = vadd.f32 %v785, %v1053
    %v1055 = vpop.f32.mrf.mxu0
    %v1056 = vpop.f32.mrf.mxu0
    %v1057 = vadd.f32 %v785, %v1056
    %v1058 = vpop.f32.mrf.mxu0
    %1059 = vmatprep.mubr.bf16.mxu0 %v904
    %1060 = vmatmul.mubr.bf16.gmra.mxu0 %v903
    %v1061 = vpop.f32.mrf.mxu0
    %v1062 = vadd.f32 %v785, %v1061
    %v1063 = vpop.f32.mrf.mxu0
    %v1064 = vpop.f32.mrf.mxu0
    %v1065 = vadd.f32 %v785, %v1064
    %v1066 = vpop.f32.mrf.mxu0
    %1067 = vmatprep.mubr.bf16.mxu0 %v906
    %1068 = vmatmul.mubr.bf16.gmra.mxu0 %v905
    %v1069 = vpop.f32.mrf.mxu0
    %v1070 = vadd.f32 %v785, %v1069
    %v1071 = vpop.f32.mrf.mxu0
    %v1072 = vpop.f32.mrf.mxu0
    %v1073 = vadd.f32 %v785, %v1072
    %v1074 = vpop.f32.mrf.mxu0
    %1075 = vmatprep.mubr.bf16.mxu0 %v908
    %1076 = vmatmul.mubr.bf16.gmra.mxu0 %v907
    %v1077 = vpop.f32.mrf.mxu0
    %v1078 = vadd.f32 %v785, %v1077
    %v1079 = vpop.f32.mrf.mxu0
    %v1080 = vpop.f32.mrf.mxu0
    %v1081 = vadd.f32 %v785, %v1080
    %v1082 = vpop.f32.mrf.mxu0
    %1083 = vmatprep.mubr.bf16.mxu0 %v910
    %1084 = vmatmul.mubr.bf16.gmra.mxu0 %v909
    %v1085 = vpop.f32.mrf.mxu0
    %v1086 = vadd.f32 %v785, %v1085
    %v1087 = vpop.f32.mrf.mxu0
    %v1088 = vpop.f32.mrf.mxu0
    %v1089 = vadd.f32 %v785, %v1088
    %v1090 = vpop.f32.mrf.mxu0
    %1091 = vmatprep.mubr.bf16.mxu0 %v912
    %1092 = vmatmul.mubr.bf16.gmra.mxu0 %v911
    %v1093 = vpop.f32.mrf.mxu0
    %v1094 = vadd.f32 %v785, %v1093
    %v1095 = vpop.f32.mrf.mxu0
    %v1096 = vpop.f32.mrf.mxu0
    %v1097 = vadd.f32 %v785, %v1096
    %v1098 = vpop.f32.mrf.mxu0
    %1099 = vmatprep.mubr.bf16.mxu0 %v914
    %1100 = vmatmul.mubr.bf16.gmra.mxu0 %v913
    %v1101 = vpop.f32.mrf.mxu0
    %v1102 = vadd.f32 %v785, %v1101
    %v1103 = vpop.f32.mrf.mxu0
    %v1104 = vpop.f32.mrf.mxu0
    %v1105 = vadd.f32 %v785, %v1104
    %v1106 = vpop.f32.mrf.mxu0
    %1107 = vdwg.mxu0
    %v1108 = vmax.f32 %v982, 0.0
    %v1109 = vmax.f32 %v985, 0.0
    %v1110 = vmax.f32 %v990, 0.0
    %v1111 = vmax.f32 %v993, 0.0
    %v1112 = vmax.f32 %v998, 0.0
    %v1113 = vmax.f32 %v1001, 0.0
    %v1114 = vmax.f32 %v1006, 0.0
    %v1115 = vmax.f32 %v1009, 0.0
    %v1116 = vmax.f32 %v1014, 0.0
    %v1117 = vmax.f32 %v1017, 0.0
    %v1118 = vmax.f32 %v1022, 0.0
    %v1119 = vmax.f32 %v1025, 0.0
    %v1120 = vmax.f32 %v1030, 0.0
    %v1121 = vmax.f32 %v1033, 0.0
    %v1122 = vmax.f32 %v1038, 0.0
    %v1123 = vmax.f32 %v1041, 0.0
    %v1124 = vmax.f32 %v1046, 0.0
    %v1125 = vmax.f32 %v1049, 0.0
    %v1126 = vmax.f32 %v1054, 0.0
    %v1127 = vmax.f32 %v1057, 0.0
    %v1128 = vmax.f32 %v1062, 0.0
    %v1129 = vmax.f32 %v1065, 0.0
    %v1130 = vmax.f32 %v1070, 0.0
    %v1131 = vmax.f32 %v1073, 0.0
    %v1132 = vmax.f32 %v1078, 0.0
    %v1133 = vmax.f32 %v1081, 0.0
    %v1134 = vmax.f32 %v1086, 0.0
    %v1135 = vmax.f32 %v1089, 0.0
    %v1136 = vmax.f32 %v1094, 0.0
    %v1137 = vmax.f32 %v1097, 0.0
    %v1138 = vmax.f32 %v1102, 0.0
    %v1139 = vmax.f32 %v1105, 0.0
    %v1140 = vpack.c.bf16 %v1109, %v1108
    %v1141 = vpack.c.bf16 %v1111, %v1110
    %v1142 = vpack.c.bf16 %v1113, %v1112
    %v1143 = vpack.c.bf16 %v1115, %v1114
    %v1144 = vpack.c.bf16 %v1117, %v1116
    %v1145 = vpack.c.bf16 %v1119, %v1118
    %v1146 = vpack.c.bf16 %v1121, %v1120
    %v1147 = vpack.c.bf16 %v1123, %v1122
    %v1148 = vpack.c.bf16 %v1125, %v1124
    %v1149 = vpack.c.bf16 %v1127, %v1126
    %v1150 = vpack.c.bf16 %v1129, %v1128
    %v1151 = vpack.c.bf16 %v1131, %v1130
    %v1152 = vpack.c.bf16 %v1133, %v1132
    %v1153 = vpack.c.bf16 %v1135, %v1134
    %v1154 = vpack.c.bf16 %v1137, %v1136
    %v1155 = vpack.c.bf16 %v1139, %v1138
    %v1156 = vld [vmem:[#allocation10] sm:$0xf]
    %v1157 = vld [vmem:[#allocation10 + $0x4] sm:$0xf]
    %v1158 = vld [vmem:[#allocation10 + $0x8] sm:$0xf]
    %v1159 = vld [vmem:[#allocation10 + $0xc] sm:$0xf]
    %v1160 = vld [vmem:[#allocation10 + $0x10] sm:$0xf]
    %v1161 = vld [vmem:[#allocation10 + $0x14] sm:$0xf]
    %v1162 = vld [vmem:[#allocation10 + $0x18] sm:$0xf]
    %v1163 = vld [vmem:[#allocation10 + $0x1c] sm:$0xf]
    %v1164 = vld [vmem:[#allocation10 + $0x20] sm:$0xf]
    %v1165 = vld [vmem:[#allocation10 + $0x24] sm:$0xf]
    %v1166 = vld [vmem:[#allocation10 + $0x28] sm:$0xf]
    %v1167 = vld [vmem:[#allocation10 + $0x2c] sm:$0xf]
    %v1168 = vld [vmem:[#allocation10 + $0x30] sm:$0xf]
    %v1169 = vld [vmem:[#allocation10 + $0x34] sm:$0xf]
    %v1170 = vld [vmem:[#allocation10 + $0x38] sm:$0xf]
    %v1171 = vld [vmem:[#allocation10 + $0x3c] sm:$0xf]
    %v1188 = vunpack.c.l.b16 %v1156
    %v1189 = vunpack.c.l.b16 %v1157
    %v1190 = vunpack.c.l.b16 %v1158
    %v1191 = vunpack.c.l.b16 %v1159
    %v1192 = vunpack.c.l.b16 %v1160
    %v1193 = vunpack.c.l.b16 %v1161
    %v1194 = vunpack.c.l.b16 %v1162
    %v1195 = vunpack.c.l.b16 %v1163
    %v1196 = vunpack.c.l.b16 %v1164
    %v1197 = vunpack.c.l.b16 %v1165
    %v1198 = vunpack.c.l.b16 %v1166
    %v1199 = vunpack.c.l.b16 %v1167
    %v1200 = vunpack.c.l.b16 %v1168
    %v1201 = vunpack.c.l.b16 %v1169
    %v1202 = vunpack.c.l.b16 %v1170
    %v1203 = vunpack.c.l.b16 %v1171
    %v1204 = vpack.c.b16 %v1189, %v1188
    %v1205 = vpack.c.b16 %v1191, %v1190
    %v1206 = vpack.c.b16 %v1193, %v1192
    %v1207 = vpack.c.b16 %v1195, %v1194
    %v1208 = vpack.c.b16 %v1197, %v1196
    %v1209 = vpack.c.b16 %v1199, %v1198
    %v1210 = vpack.c.b16 %v1201, %v1200
    %v1211 = vpack.c.b16 %v1203, %v1202
    %1220 = vmatprep.subr.bf16.mxu0 0
    %1221 = vmatpush1.bf16.msra.mxu0 %v1211
    %1222 = vmatprep.subr.bf16.mxu0 0
    %1223 = vmatpush1.bf16.msra.mxu0 %v1210
    %1224 = vmatprep.subr.bf16.mxu0 0
    %1225 = vmatpush1.bf16.msra.mxu0 %v1209
    %1226 = vmatprep.subr.bf16.mxu0 0
    %1227 = vmatpush1.bf16.msra.mxu0 %v1208
    %1228 = vmatprep.subr.bf16.mxu0 0
    %1229 = vmatpush1.bf16.msra.mxu0 %v1207
    %1230 = vmatprep.subr.bf16.mxu0 0
    %1231 = vmatpush1.bf16.msra.mxu0 %v1206
    %1232 = vmatprep.subr.bf16.mxu0 0
    %1233 = vmatpush1.bf16.msra.mxu0 %v1205
    %1234 = vmatprep.subr.bf16.mxu0 0
    %1235 = vmatpush1.bf16.msra.mxu0 %v1204
    %1236 = vmatprep.subr.bf16.mxu0 0
    %1237 = vmatpush2.bf16.msra.mxu0 0
    %1238 = vmatprep.subr.bf16.mxu0 0
    %1239 = vmatpush2.bf16.msra.mxu0 0
    %1240 = vmatprep.subr.bf16.mxu0 0
    %1241 = vmatpush2.bf16.msra.mxu0 0
    %1242 = vmatprep.subr.bf16.mxu0 0
    %1243 = vmatpush2.bf16.msra.mxu0 0
    %1244 = vmatprep.subr.bf16.mxu0 0
    %1245 = vmatpush2.bf16.msra.mxu0 0
    %1246 = vmatprep.subr.bf16.mxu0 0
    %1247 = vmatpush2.bf16.msra.mxu0 0
    %1248 = vmatprep.subr.bf16.mxu0 0
    %1249 = vmatpush2.bf16.msra.mxu0 0
    %1250 = vmatprep.subr.bf16.mxu0 0
    %1251 = vmatpush2.bf16.msra.mxu0 0
    %1252 = vmatprep.mubr.bf16.mxu0 0
    %1253 = vmatmul.mubr.bf16.gmra.mxu0 %v1140
    %v1254 = vpop.f32.mrf.mxu0
    %v1255 = vadd.f32 0.0, %v1254
    %v1256 = vpop.f32.mrf.mxu0
    %v1257 = vpop.f32.mrf.mxu0
    %v1258 = vadd.f32 0.0, %v1257
    %v1259 = vpop.f32.mrf.mxu0
    %1260 = vmatprep.mubr.bf16.mxu0 0
    %1261 = vmatmul.mubr.bf16.gmra.mxu0 %v1141
    %v1262 = vpop.f32.mrf.mxu0
    %v1263 = vadd.f32 0.0, %v1262
    %v1264 = vpop.f32.mrf.mxu0
    %v1265 = vpop.f32.mrf.mxu0
    %v1266 = vadd.f32 0.0, %v1265
    %v1267 = vpop.f32.mrf.mxu0
    %1268 = vmatprep.mubr.bf16.mxu0 0
    %1269 = vmatmul.mubr.bf16.gmra.mxu0 %v1142
    %v1270 = vpop.f32.mrf.mxu0
    %v1271 = vadd.f32 0.0, %v1270
    %v1272 = vpop.f32.mrf.mxu0
    %v1273 = vpop.f32.mrf.mxu0
    %v1274 = vadd.f32 0.0, %v1273
    %v1275 = vpop.f32.mrf.mxu0
    %1276 = vmatprep.mubr.bf16.mxu0 0
    %1277 = vmatmul.mubr.bf16.gmra.mxu0 %v1143
    %v1278 = vpop.f32.mrf.mxu0
    %v1279 = vadd.f32 0.0, %v1278
    %v1280 = vpop.f32.mrf.mxu0
    %v1281 = vpop.f32.mrf.mxu0
    %v1282 = vadd.f32 0.0, %v1281
    %v1283 = vpop.f32.mrf.mxu0
    %1284 = vmatprep.mubr.bf16.mxu0 0
    %1285 = vmatmul.mubr.bf16.gmra.mxu0 %v1144
    %v1286 = vpop.f32.mrf.mxu0
    %v1287 = vadd.f32 0.0, %v1286
    %v1288 = vpop.f32.mrf.mxu0
    %v1289 = vpop.f32.mrf.mxu0
    %v1290 = vadd.f32 0.0, %v1289
    %v1291 = vpop.f32.mrf.mxu0
    %1292 = vmatprep.mubr.bf16.mxu0 0
    %1293 = vmatmul.mubr.bf16.gmra.mxu0 %v1145
    %v1294 = vpop.f32.mrf.mxu0
    %v1295 = vadd.f32 0.0, %v1294
    %v1296 = vpop.f32.mrf.mxu0
    %v1297 = vpop.f32.mrf.mxu0
    %v1298 = vadd.f32 0.0, %v1297
    %v1299 = vpop.f32.mrf.mxu0
    %1300 = vmatprep.mubr.bf16.mxu0 0
    %1301 = vmatmul.mubr.bf16.gmra.mxu0 %v1146
    %v1302 = vpop.f32.mrf.mxu0
    %v1303 = vadd.f32 0.0, %v1302
    %v1304 = vpop.f32.mrf.mxu0
    %v1305 = vpop.f32.mrf.mxu0
    %v1306 = vadd.f32 0.0, %v1305
    %v1307 = vpop.f32.mrf.mxu0
    %1308 = vmatprep.mubr.bf16.mxu0 0
    %1309 = vmatmul.mubr.bf16.gmra.mxu0 %v1147
    %v1310 = vpop.f32.mrf.mxu0
    %v1311 = vadd.f32 0.0, %v1310
    %v1312 = vpop.f32.mrf.mxu0
    %v1313 = vpop.f32.mrf.mxu0
    %v1314 = vadd.f32 0.0, %v1313
    %v1315 = vpop.f32.mrf.mxu0
    %1316 = vmatprep.mubr.bf16.mxu0 0
    %1317 = vmatmul.mubr.bf16.gmra.mxu0 %v1148
    %v1318 = vpop.f32.mrf.mxu0
    %v1319 = vadd.f32 0.0, %v1318
    %v1320 = vpop.f32.mrf.mxu0
    %v1321 = vpop.f32.mrf.mxu0
    %v1322 = vadd.f32 0.0, %v1321
    %v1323 = vpop.f32.mrf.mxu0
    %1324 = vmatprep.mubr.bf16.mxu0 0
    %1325 = vmatmul.mubr.bf16.gmra.mxu0 %v1149
    %v1326 = vpop.f32.mrf.mxu0
    %v1327 = vadd.f32 0.0, %v1326
    %v1328 = vpop.f32.mrf.mxu0
    %v1329 = vpop.f32.mrf.mxu0
    %v1330 = vadd.f32 0.0, %v1329
    %v1331 = vpop.f32.mrf.mxu0
    %1332 = vmatprep.mubr.bf16.mxu0 0
    %1333 = vmatmul.mubr.bf16.gmra.mxu0 %v1150
    %v1334 = vpop.f32.mrf.mxu0
    %v1335 = vadd.f32 0.0, %v1334
    %v1336 = vpop.f32.mrf.mxu0
    %v1337 = vpop.f32.mrf.mxu0
    %v1338 = vadd.f32 0.0, %v1337
    %v1339 = vpop.f32.mrf.mxu0
    %1340 = vmatprep.mubr.bf16.mxu0 0
    %1341 = vmatmul.mubr.bf16.gmra.mxu0 %v1151
    %v1342 = vpop.f32.mrf.mxu0
    %v1343 = vadd.f32 0.0, %v1342
    %v1344 = vpop.f32.mrf.mxu0
    %v1345 = vpop.f32.mrf.mxu0
    %v1346 = vadd.f32 0.0, %v1345
    %v1347 = vpop.f32.mrf.mxu0
    %1348 = vmatprep.mubr.bf16.mxu0 0
    %1349 = vmatmul.mubr.bf16.gmra.mxu0 %v1152
    %v1350 = vpop.f32.mrf.mxu0
    %v1351 = vadd.f32 0.0, %v1350
    %v1352 = vpop.f32.mrf.mxu0
    %v1353 = vpop.f32.mrf.mxu0
    %v1354 = vadd.f32 0.0, %v1353
    %v1355 = vpop.f32.mrf.mxu0
    %1356 = vmatprep.mubr.bf16.mxu0 0
    %1357 = vmatmul.mubr.bf16.gmra.mxu0 %v1153
    %v1358 = vpop.f32.mrf.mxu0
    %v1359 = vadd.f32 0.0, %v1358
    %v1360 = vpop.f32.mrf.mxu0
    %v1361 = vpop.f32.mrf.mxu0
    %v1362 = vadd.f32 0.0, %v1361
    %v1363 = vpop.f32.mrf.mxu0
    %1364 = vmatprep.mubr.bf16.mxu0 0
    %1365 = vmatmul.mubr.bf16.gmra.mxu0 %v1154
    %v1366 = vpop.f32.mrf.mxu0
    %v1367 = vadd.f32 0.0, %v1366
    %v1368 = vpop.f32.mrf.mxu0
    %v1369 = vpop.f32.mrf.mxu0
    %v1370 = vadd.f32 0.0, %v1369
    %v1371 = vpop.f32.mrf.mxu0
    %1372 = vmatprep.mubr.bf16.mxu0 0
    %1373 = vmatmul.mubr.bf16.gmra.mxu0 %v1155
    %v1374 = vpop.f32.mrf.mxu0
    %v1375 = vadd.f32 0.0, %v1374
    %v1376 = vpop.f32.mrf.mxu0
    %v1377 = vpop.f32.mrf.mxu0
    %v1378 = vadd.f32 0.0, %v1377
    %v1379 = vpop.f32.mrf.mxu0
    %1380 = vdwg.mxu0
    %v1381 = vpack.c.bf16 %v1258, %v1255
    %v1382 = vpack.c.bf16 %v1266, %v1263
    %v1383 = vpack.c.bf16 %v1274, %v1271
    %v1384 = vpack.c.bf16 %v1282, %v1279
    %v1385 = vpack.c.bf16 %v1290, %v1287
    %v1386 = vpack.c.bf16 %v1298, %v1295
    %v1387 = vpack.c.bf16 %v1306, %v1303
    %v1388 = vpack.c.bf16 %v1314, %v1311
    %v1389 = vpack.c.bf16 %v1322, %v1319
    %v1390 = vpack.c.bf16 %v1330, %v1327
    %v1391 = vpack.c.bf16 %v1338, %v1335
    %v1392 = vpack.c.bf16 %v1346, %v1343
    %v1393 = vpack.c.bf16 %v1354, %v1351
    %v1394 = vpack.c.bf16 %v1362, %v1359
    %v1395 = vpack.c.bf16 %v1370, %v1367
    %v1396 = vpack.c.bf16 %v1378, %v1375
    %v1397 = vld [vmem:[%s7] sm:$0x1]
    %v1399 = vlaneseq
    %v1400 = vshrl.u32 %v1399, 7
    %v1401 = vsub.s32 0, %v1400
    %v1402 = vrot.slane %v1397, %v1401
    %1404 = vmatprep.subr.bf16.mxu0 0
    %1405 = vmatpush1.bf16.msra.mxu0 %v1388
    %1406 = vmatprep.subr.bf16.mxu0 0
    %1407 = vmatpush1.bf16.msra.mxu0 %v1387
    %1408 = vmatprep.subr.bf16.mxu0 0
    %1409 = vmatpush1.bf16.msra.mxu0 %v1386
    %1410 = vmatprep.subr.bf16.mxu0 0
    %1411 = vmatpush1.bf16.msra.mxu0 %v1385
    %1412 = vmatprep.subr.bf16.mxu0 0
    %1413 = vmatpush1.bf16.msra.mxu0 %v1384
    %1414 = vmatprep.subr.bf16.mxu0 0
    %1415 = vmatpush1.bf16.msra.mxu0 %v1383
    %1416 = vmatprep.subr.bf16.mxu0 0
    %1417 = vmatpush1.bf16.msra.mxu0 %v1382
    %1418 = vmatprep.subr.bf16.mxu0 0
    %1419 = vmatpush1.bf16.msra.mxu0 %v1381
    %1420 = vmatprep.subr.bf16.mxu0 0
    %1421 = vmatpush2.bf16.msra.mxu0 %v1396
    %1422 = vmatprep.subr.bf16.mxu0 0
    %1423 = vmatpush2.bf16.msra.mxu0 %v1395
    %1424 = vmatprep.subr.bf16.mxu0 0
    %1425 = vmatpush2.bf16.msra.mxu0 %v1394
    %1426 = vmatprep.subr.bf16.mxu0 0
    %1427 = vmatpush2.bf16.msra.mxu0 %v1393
    %1428 = vmatprep.subr.bf16.mxu0 0
    %1429 = vmatpush2.bf16.msra.mxu0 %v1392
    %1430 = vmatprep.subr.bf16.mxu0 0
    %1431 = vmatpush2.bf16.msra.mxu0 %v1391
    %1432 = vmatprep.subr.bf16.mxu0 0
    %1433 = vmatpush2.bf16.msra.mxu0 %v1390
    %1434 = vmatprep.subr.bf16.mxu0 0
    %1435 = vmatpush2.bf16.msra.mxu0 %v1389
    %1436 = vmatprep.mubr.bf16.mxu0 %v884
    %1437 = vmatmul.mubr.bf16.gmra.mxu0 %v883
    %v1438 = vpop.f32.mrf.mxu0
    %v1439 = vadd.f32 %v1402, %v1438
    %v1440 = vpop.f32.mrf.mxu0
    %v1441 = vpop.f32.mrf.mxu0
    %v1442 = vadd.f32 %v1402, %v1441
    %v1443 = vpop.f32.mrf.mxu0
    %1444 = vmatprep.mubr.bf16.mxu0 %v886
    %1445 = vmatmul.mubr.bf16.gmra.mxu0 %v885
    %v1446 = vpop.f32.mrf.mxu0
    %v1447 = vadd.f32 %v1402, %v1446
    %v1448 = vpop.f32.mrf.mxu0
    %v1449 = vpop.f32.mrf.mxu0
    %v1450 = vadd.f32 %v1402, %v1449
    %v1451 = vpop.f32.mrf.mxu0
    %1452 = vmatprep.mubr.bf16.mxu0 %v888
    %1453 = vmatmul.mubr.bf16.gmra.mxu0 %v887
    %v1454 = vpop.f32.mrf.mxu0
    %v1455 = vadd.f32 %v1402, %v1454
    %v1456 = vpop.f32.mrf.mxu0
    %v1457 = vpop.f32.mrf.mxu0
    %v1458 = vadd.f32 %v1402, %v1457
    %v1459 = vpop.f32.mrf.mxu0
    %1460 = vmatprep.mubr.bf16.mxu0 %v890
    %1461 = vmatmul.mubr.bf16.gmra.mxu0 %v889
    %v1462 = vpop.f32.mrf.mxu0
    %v1463 = vadd.f32 %v1402, %v1462
    %v1464 = vpop.f32.mrf.mxu0
    %v1465 = vpop.f32.mrf.mxu0
    %v1466 = vadd.f32 %v1402, %v1465
    %v1467 = vpop.f32.mrf.mxu0
    %1468 = vmatprep.mubr.bf16.mxu0 %v892
    %1469 = vmatmul.mubr.bf16.gmra.mxu0 %v891
    %v1470 = vpop.f32.mrf.mxu0
    %v1471 = vadd.f32 %v1402, %v1470
    %v1472 = vpop.f32.mrf.mxu0
    %v1473 = vpop.f32.mrf.mxu0
    %v1474 = vadd.f32 %v1402, %v1473
    %v1475 = vpop.f32.mrf.mxu0
    %1476 = vmatprep.mubr.bf16.mxu0 %v894
    %1477 = vmatmul.mubr.bf16.gmra.mxu0 %v893
    %v1478 = vpop.f32.mrf.mxu0
    %v1479 = vadd.f32 %v1402, %v1478
    %v1480 = vpop.f32.mrf.mxu0
    %v1481 = vpop.f32.mrf.mxu0
    %v1482 = vadd.f32 %v1402, %v1481
    %v1483 = vpop.f32.mrf.mxu0
    %1484 = vmatprep.mubr.bf16.mxu0 %v896
    %1485 = vmatmul.mubr.bf16.gmra.mxu0 %v895
    %v1486 = vpop.f32.mrf.mxu0
    %v1487 = vadd.f32 %v1402, %v1486
    %v1488 = vpop.f32.mrf.mxu0
    %v1489 = vpop.f32.mrf.mxu0
    %v1490 = vadd.f32 %v1402, %v1489
    %v1491 = vpop.f32.mrf.mxu0
    %1492 = vmatprep.mubr.bf16.mxu0 %v898
    %1493 = vmatmul.mubr.bf16.gmra.mxu0 %v897
    %v1494 = vpop.f32.mrf.mxu0
    %v1495 = vadd.f32 %v1402, %v1494
    %v1496 = vpop.f32.mrf.mxu0
    %v1497 = vpop.f32.mrf.mxu0
    %v1498 = vadd.f32 %v1402, %v1497
    %v1499 = vpop.f32.mrf.mxu0
    %1500 = vmatprep.mubr.bf16.mxu0 %v900
    %1501 = vmatmul.mubr.bf16.gmra.mxu0 %v899
    %v1502 = vpop.f32.mrf.mxu0
    %v1503 = vadd.f32 %v1402, %v1502
    %v1504 = vpop.f32.mrf.mxu0
    %v1505 = vpop.f32.mrf.mxu0
    %v1506 = vadd.f32 %v1402, %v1505
    %v1507 = vpop.f32.mrf.mxu0
    %1508 = vmatprep.mubr.bf16.mxu0 %v902
    %1509 = vmatmul.mubr.bf16.gmra.mxu0 %v901
    %v1510 = vpop.f32.mrf.mxu0
    %v1511 = vadd.f32 %v1402, %v1510
    %v1512 = vpop.f32.mrf.mxu0
    %v1513 = vpop.f32.mrf.mxu0
    %v1514 = vadd.f32 %v1402, %v1513
    %v1515 = vpop.f32.mrf.mxu0
    %1516 = vmatprep.mubr.bf16.mxu0 %v904
    %1517 = vmatmul.mubr.bf16.gmra.mxu0 %v903
    %v1518 = vpop.f32.mrf.mxu0
    %v1519 = vadd.f32 %v1402, %v1518
    %v1520 = vpop.f32.mrf.mxu0
    %v1521 = vpop.f32.mrf.mxu0
    %v1522 = vadd.f32 %v1402, %v1521
    %v1523 = vpop.f32.mrf.mxu0
    %1524 = vmatprep.mubr.bf16.mxu0 %v906
    %1525 = vmatmul.mubr.bf16.gmra.mxu0 %v905
    %v1526 = vpop.f32.mrf.mxu0
    %v1527 = vadd.f32 %v1402, %v1526
    %v1528 = vpop.f32.mrf.mxu0
    %v1529 = vpop.f32.mrf.mxu0
    %v1530 = vadd.f32 %v1402, %v1529
    %v1531 = vpop.f32.mrf.mxu0
    %1532 = vmatprep.mubr.bf16.mxu0 %v908
    %1533 = vmatmul.mubr.bf16.gmra.mxu0 %v907
    %v1534 = vpop.f32.mrf.mxu0
    %v1535 = vadd.f32 %v1402, %v1534
    %v1536 = vpop.f32.mrf.mxu0
    %v1537 = vpop.f32.mrf.mxu0
    %v1538 = vadd.f32 %v1402, %v1537
    %v1539 = vpop.f32.mrf.mxu0
    %1540 = vmatprep.mubr.bf16.mxu0 %v910
    %1541 = vmatmul.mubr.bf16.gmra.mxu0 %v909
    %v1542 = vpop.f32.mrf.mxu0
    %v1543 = vadd.f32 %v1402, %v1542
    %v1544 = vpop.f32.mrf.mxu0
    %v1545 = vpop.f32.mrf.mxu0
    %v1546 = vadd.f32 %v1402, %v1545
    %v1547 = vpop.f32.mrf.mxu0
    %1548 = vmatprep.mubr.bf16.mxu0 %v912
    %1549 = vmatmul.mubr.bf16.gmra.mxu0 %v911
    %v1550 = vpop.f32.mrf.mxu0
    %v1551 = vadd.f32 %v1402, %v1550
    %v1552 = vpop.f32.mrf.mxu0
    %v1553 = vpop.f32.mrf.mxu0
    %v1554 = vadd.f32 %v1402, %v1553
    %v1555 = vpop.f32.mrf.mxu0
    %1556 = vmatprep.mubr.bf16.mxu0 %v914
    %1557 = vmatmul.mubr.bf16.gmra.mxu0 %v913
    %v1558 = vpop.f32.mrf.mxu0
    %v1559 = vadd.f32 %v1402, %v1558
    %v1560 = vpop.f32.mrf.mxu0
    %v1561 = vpop.f32.mrf.mxu0
    %v1562 = vadd.f32 %v1402, %v1561
    %v1563 = vpop.f32.mrf.mxu0
    %1564 = vdwg.mxu0
    %1565 = vst [vmem:[#allocation11] sm:$0xff] %v1439
    %1566 = vst [vmem:[#allocation11 + $0x8] sm:$0xff] %v1442
    %1567 = vst [vmem:[#allocation11 + $0x10] sm:$0xff] %v1447
    %1568 = vst [vmem:[#allocation11 + $0x18] sm:$0xff] %v1450
    %1569 = vst [vmem:[#allocation11 + $0x20] sm:$0xff] %v1455
    %1570 = vst [vmem:[#allocation11 + $0x28] sm:$0xff] %v1458
    %1571 = vst [vmem:[#allocation11 + $0x30] sm:$0xff] %v1463
    %1572 = vst [vmem:[#allocation11 + $0x38] sm:$0xff] %v1466
    %1573 = vst [vmem:[#allocation11 + $0x40] sm:$0xff] %v1471
    %1574 = vst [vmem:[#allocation11 + $0x48] sm:$0xff] %v1474
    %1575 = vst [vmem:[#allocation11 + $0x50] sm:$0xff] %v1479
    %1576 = vst [vmem:[#allocation11 + $0x58] sm:$0xff] %v1482
    %1577 = vst [vmem:[#allocation11 + $0x60] sm:$0xff] %v1487
    %1578 = vst [vmem:[#allocation11 + $0x68] sm:$0xff] %v1490
    %1579 = vst [vmem:[#allocation11 + $0x70] sm:$0xff] %v1495
    %1580 = vst [vmem:[#allocation11 + $0x78] sm:$0xff] %v1498
    %1581 = vst [vmem:[#allocation11 + $0x80] sm:$0xff] %v1503
    %1582 = vst [vmem:[#allocation11 + $0x88] sm:$0xff] %v1506
    %1583 = vst [vmem:[#allocation11 + $0x90] sm:$0xff] %v1511
    %1584 = vst [vmem:[#allocation11 + $0x98] sm:$0xff] %v1514
    %1585 = vst [vmem:[#allocation11 + $0xa0] sm:$0xff] %v1519
    %1586 = vst [vmem:[#allocation11 + $0xa8] sm:$0xff] %v1522
    %1587 = vst [vmem:[#allocation11 + $0xb0] sm:$0xff] %v1527
    %1588 = vst [vmem:[#allocation11 + $0xb8] sm:$0xff] %v1530
    %1589 = vst [vmem:[#allocation11 + $0xc0] sm:$0xff] %v1535
    %1590 = vst [vmem:[#allocation11 + $0xc8] sm:$0xff] %v1538
    %1591 = vst [vmem:[#allocation11 + $0xd0] sm:$0xff] %v1543
    %1592 = vst [vmem:[#allocation11 + $0xd8] sm:$0xff] %v1546
    %1593 = vst [vmem:[#allocation11 + $0xe0] sm:$0xff] %v1551
    %1594 = vst [vmem:[#allocation11 + $0xe8] sm:$0xff] %v1554
    %1595 = vst [vmem:[#allocation11 + $0xf0] sm:$0xff] %v1559
    %1596 = vst [vmem:[#allocation11 + $0xf8] sm:$0xff] %v1562
    // Predicated region
    $region54: #{tpu_custom_call.1} parent=1 // pred_check
      _
    $region55: #{tpu_custom_call.1} parent=1 // pred_check_branch
      %1598 = sbr.rel (0) target = $region57
    $region56: #{tpu_custom_call.1} parent=1 // pred_region
      %s1600 = ssub.s32 4096, 4096
      %1601 = vsyncadd [#allocation4], %s1600
      %s1602 = sshll.u32 [#allocation11], 4
      %s1603 = int_to_ptr.vmem [resolvable:$true] %s1602
      %1608 = dma.vmem_to_hbm [thread:$0]  %s1603, 4096, %s8, [#allocation4], 128, 128, 8
    $region57: #{tpu_custom_call.1} parent=1 // pred_fallthru
      _
    // Predicated region
    $region58: #{tpu_custom_call.1} parent=1 // pred_check
      _
    $region59: #{tpu_custom_call.1} parent=1 // pred_check_branch
      %1610 = sbr.rel (0) target = $region61
    $region60: #{tpu_custom_call.1} parent=1 // pred_region
      %1611 = dma.done [#allocation4], 4096
    $region61: #{tpu_custom_call.1} parent=1 // pred_fallthru
      _
    %1612 = vsyncpa [#allocation3], 1
    %1613 = vsyncpa [#allocation6], 1
    %1614 = vsyncpa [#allocation9], 1
    %1615 = vsyncpa [#allocation4], 1

</llo_original>
